<compile_context>
chip_gen: v6e
topology: v6e:2x2x1
jax: 0.10.0
libtpu: 0.0.40
codegen_flags: <defaults>
</compile_context>

<pallas_src>
import numpy as np

import jax
import jax.numpy as jnp
from jax import lax
from jax.experimental import pallas as pl
from jax.experimental.pallas import tpu as pltpu


# ----------------------------------------------------------------------------- #
# Configuration (MultiDecoder(feat_size=32, shapes={'image': (16,16,3),
# 'vector': (8,)}, cnn_depth=8, kernel_size=4, minres=4, mlp_layers=2,
# mlp_units=32, act='SiLU', norm=True, image_dist='mse',
# vector_dist='symlog_mse', cnn_sigmoid=False)).
# ----------------------------------------------------------------------------- #
FEAT = 32
IMG_HW, IMG_C = 16, 3
CNN_DEPTH = 8
MINRES = 4
KSIZE = 4
LAYER_NUM = 2                                            # log2(16) - log2(4)
EMBED = MINRES ** 2 * CNN_DEPTH * 2 ** (LAYER_NUM - 1)   # 256
C0_IN = EMBED // MINRES ** 2                             # 16
C0_OUT = C0_IN // 2                                      # 8
MID_HW = 2 * MINRES                                      # 8
MID_FLAT = MID_HW * MID_HW * C0_OUT                      # 512
IMG_FLAT = IMG_HW * IMG_HW * IMG_C                       # 768
MLP_LAYERS = 2
MLP_UNITS = 32
VEC_DIM = 8
VEC_PAD = 128                                            # lane-dense vector output
LN_EPS = 1e-3

# bf16 weight-slab layout (lane width = IMG_FLAT = 768; all lane offsets 128-aligned,
# all row offsets multiples of the bf16 sublane tile of 16).
W_A1_ROW = FEAT                        # rows 32..543 : composed ConvT#1 operator
W_WMEAN_ROW = W_A1_ROW + MID_FLAT      # rows 544..575: mean-layer weight (zero-padded)
WSLAB_ROWS = W_WMEAN_ROW + FEAT        # 576
W_WM0_COL = 512                        # rows 0..31  : MLP layer-0 weight
W_WM1_COL = 640                        # rows 0..31  : MLP layer-1 weight

# f32 vector-slab layout (8 rows x 768 lanes).
V_C0_ROW, V_G0_ROW, V_BE0_ROW, V_B1_ROW = 0, 1, 2, 3
V_BMEAN_COL = 512                      # row 0
V_GM0_COL, V_BEM0_COL = 512, 640       # row 1
V_GM1_COL, V_BEM1_COL = 512, 640       # row 2


# ----------------------------------------------------------------------------- #
# Init-time weight generation (PyTorch layouts) and preprocessing (runs once).
# ----------------------------------------------------------------------------- #
def init_params(key):
    ks = jax.random.split(key, 16)

    def nrm(k, shape, scale=0.1):
        return np.asarray(jax.random.normal(k, shape, jnp.float32)) * scale

    raw = {}
    raw["wlin"] = nrm(ks[0], (FEAT, EMBED))                # Linear(32 -> 256), bias
    raw["blin"] = nrm(ks[1], (EMBED,))
    raw["w0"] = nrm(ks[2], (C0_IN, C0_OUT, KSIZE, KSIZE))  # ConvT(16->8), no bias
    raw["g0"] = 1.0 + nrm(ks[3], (C0_OUT,))                # ImgChLayerNorm(8)
    raw["be0"] = nrm(ks[4], (C0_OUT,))
    raw["w1"] = nrm(ks[5], (C0_OUT, IMG_C, KSIZE, KSIZE))  # ConvT(8->3), bias
    raw["b1"] = nrm(ks[6], (IMG_C,))
    raw["wm0"] = nrm(ks[7], (FEAT, MLP_UNITS))             # MLP layer 0 (no bias)
    raw["gm0"] = 1.0 + nrm(ks[8], (MLP_UNITS,))
    raw["bem0"] = nrm(ks[9], (MLP_UNITS,))
    raw["wm1"] = nrm(ks[10], (MLP_UNITS, MLP_UNITS))       # MLP layer 1 (no bias)
    raw["gm1"] = 1.0 + nrm(ks[11], (MLP_UNITS,))
    raw["bem1"] = nrm(ks[12], (MLP_UNITS,))
    raw["wmean"] = nrm(ks[13], (MLP_UNITS, VEC_DIM))       # mean_layer['vector'], bias
    raw["bmean"] = nrm(ks[14], (VEC_DIM,))
    return raw


def _dense_convT_op(w_pt, h_in, w_in):
    """Dense operator of a stride-2, pad-1 ConvTranspose2d in flat-NHWC layout.

    w_pt: (Cin, Cout, K, K) PyTorch layout.
    Returns op of shape (h_in*w_in*Cin, 2*h_in*2*w_in*Cout) with
      op[(iy*w_in+ix)*Cin+ci, (oy*w_out+ox)*Cout+co] = w_pt[ci, co, oy+1-2*iy, ox+1-2*ix].
    """
    cin, cout, k, _ = w_pt.shape
    h_out, w_out = 2 * h_in, 2 * w_in
    op = np.zeros((h_in * w_in * cin, h_out * w_out * cout), np.float64)
    for iy in range(h_in):
        for kh in range(k):
            oy = 2 * iy - 1 + kh
            if not 0 <= oy < h_out:
                continue
            for ix in range(w_in):
                for kw in range(k):
                    ox = 2 * ix - 1 + kw
                    if not 0 <= ox < w_out:
                        continue
                    r = (iy * w_in + ix) * cin
                    c = (oy * w_out + ox) * cout
                    op[r:r + cin, c:c + cout] += w_pt[:, :, kh, kw]
    return op


def prepare_params(raw):
    """Fold the affine stages and pack everything into three kernel inputs."""
    # Linear + ConvT#0 composed:  mid_pre = feat @ a0 + c0  (flat (oy, ox, c)).
    conv0_op = _dense_convT_op(raw["w0"], MINRES, MINRES)          # (256, 512)
    a0 = raw["wlin"].astype(np.float64) @ conv0_op                 # (32, 512)
    c0 = raw["blin"].astype(np.float64) @ conv0_op                 # (512,)
    # ConvT#1 as a dense operator:  img = act @ a1 + tile(b1).
    a1 = _dense_convT_op(raw["w1"], MID_HW, MID_HW)                # (512, 768)

    wslab = np.zeros((WSLAB_ROWS, IMG_FLAT), np.float64)
    wslab[0:FEAT, 0:MID_FLAT] = a0
    wslab[0:FEAT, W_WM0_COL:W_WM0_COL + MLP_UNITS] = raw["wm0"]
    wslab[0:FEAT, W_WM1_COL:W_WM1_COL + MLP_UNITS] = raw["wm1"]
    wslab[W_A1_ROW:W_A1_ROW + MID_FLAT, 0:IMG_FLAT] = a1
    wslab[W_WMEAN_ROW:W_WMEAN_ROW + FEAT, 0:VEC_DIM] = raw["wmean"]   # zero-padded to 128

    vslab = np.zeros((8, IMG_FLAT), np.float32)
    vslab[V_C0_ROW, 0:MID_FLAT] = c0
    vslab[V_C0_ROW, V_BMEAN_COL:V_BMEAN_COL + VEC_DIM] = raw["bmean"]
    vslab[V_G0_ROW, 0:MID_FLAT] = np.tile(raw["g0"], MID_HW * MID_HW)
    vslab[V_G0_ROW, V_GM0_COL:V_GM0_COL + MLP_UNITS] = raw["gm0"]
    vslab[V_G0_ROW, V_BEM0_COL:V_BEM0_COL + MLP_UNITS] = raw["bem0"]
    vslab[V_BE0_ROW, 0:MID_FLAT] = np.tile(raw["be0"], MID_HW * MID_HW)
    vslab[V_BE0_ROW, V_GM1_COL:V_GM1_COL + MLP_UNITS] = raw["gm1"]
    vslab[V_BE0_ROW, V_BEM1_COL:V_BEM1_COL + MLP_UNITS] = raw["bem1"]
    vslab[V_B1_ROW, 0:IMG_FLAT] = np.tile(raw["b1"], IMG_HW * IMG_HW)

    # Block-diagonal per-pixel channel averaging matrix (64 pixels x 8 channels).
    avg = np.kron(np.eye(MID_HW * MID_HW), np.full((C0_OUT, C0_OUT), 1.0 / C0_OUT))

    return {"wslab": jnp.asarray(wslab, jnp.bfloat16),
            "avg": jnp.asarray(avg, jnp.float32),
            "vslab": jnp.asarray(vslab, jnp.float32)}


# ----------------------------------------------------------------------------- #
# The fused kernel: whole batch in one invocation, everything stays in vregs.
# ----------------------------------------------------------------------------- #
def _fused_decoder_kernel(feat_ref, wslab_ref, avg_ref, vslab_ref, img_ref, vec_ref):
    f32, bf16 = jnp.float32, jnp.bfloat16

    feat = feat_ref[...]                                            # (B, 32) f32
    feat_bf = feat.astype(bf16)

    # ---------------- CNN branch ----------------
    # (1) Linear(32->256) + ConvT#0 folded:  mid_pre = feat @ A0 + c0   -> (B, 512)
    a0 = wslab_ref[pl.ds(0, FEAT), pl.ds(0, MID_FLAT)]              # (32, 512) bf16
    c0 = vslab_ref[pl.ds(V_C0_ROW, 1), pl.ds(0, MID_FLAT)]          # (1, 512)  f32
    mid = jnp.dot(feat_bf, a0, preferred_element_type=f32) + c0

    # (2) ImgChLayerNorm(8) + SiLU.  Per-pixel channel stats via the block-diagonal
    #     averaging matmul (f32), stable (x - mu)^2 variance form.
    avg = avg_ref[...]                                              # (512, 512) f32
    mu = jnp.dot(mid, avg, preferred_element_type=f32)
    d = mid - mu
    var = jnp.dot(d * d, avg, preferred_element_type=f32)
    g0 = vslab_ref[pl.ds(V_G0_ROW, 1), pl.ds(0, MID_FLAT)]
    b0 = vslab_ref[pl.ds(V_BE0_ROW, 1), pl.ds(0, MID_FLAT)]
    y = d * lax.rsqrt(var + LN_EPS) * g0 + b0
    act = y * jax.nn.sigmoid(y)                                     # SiLU

    # (3) ConvT#1 + bias folded:  img = act @ A1 + b1  -> lane-dense (B, 768) row.
    a1 = wslab_ref[pl.ds(W_A1_ROW, MID_FLAT), pl.ds(0, IMG_FLAT)]   # (512, 768) bf16
    b1 = vslab_ref[pl.ds(V_B1_ROW, 1), pl.ds(0, IMG_FLAT)]          # (1, 768)
    img_ref[...] = jnp.dot(act.astype(bf16), a1, preferred_element_type=f32) + b1

    # ---------------- MLP branch ----------------
    wm0 = wslab_ref[pl.ds(0, FEAT), pl.ds(W_WM0_COL, MLP_UNITS)]
    wm1 = wslab_ref[pl.ds(0, FEAT), pl.ds(W_WM1_COL, MLP_UNITS)]
    wmean = wslab_ref[pl.ds(W_WMEAN_ROW, FEAT), pl.ds(0, VEC_PAD)]  # zero-padded cols
    gm0 = vslab_ref[pl.ds(V_G0_ROW, 1), pl.ds(V_GM0_COL, MLP_UNITS)]
    bem0 = vslab_ref[pl.ds(V_G0_ROW, 1), pl.ds(V_BEM0_COL, MLP_UNITS)]
    gm1 = vslab_ref[pl.ds(V_BE0_ROW, 1), pl.ds(V_GM1_COL, MLP_UNITS)]
    bem1 = vslab_ref[pl.ds(V_BE0_ROW, 1), pl.ds(V_BEM1_COL, MLP_UNITS)]
    bmean = vslab_ref[pl.ds(V_C0_ROW, 1), pl.ds(V_BMEAN_COL, VEC_PAD)]  # zero-padded

    h = feat_bf
    for w, g, be in ((wm0, gm0, bem0), (wm1, gm1, bem1)):
        z = jnp.dot(h, w, preferred_element_type=f32)               # Linear, no bias
        m = jnp.mean(z, axis=-1, keepdims=True)
        dz = z - m
        v = jnp.mean(dz * dz, axis=-1, keepdims=True)
        z = dz * lax.rsqrt(v + LN_EPS) * g + be
        z = z * jax.nn.sigmoid(z)                                   # SiLU
        h = z.astype(bf16)
    vec_ref[...] = jnp.dot(h, wmean, preferred_element_type=f32) + bmean  # (B, 128)


def _full_spec(shape):
    nd = len(shape)
    return pl.BlockSpec(shape, lambda i, _z=(0,) * nd: _z)


@jax.jit
def multi_decoder_forward(features, params):
    """features: (B, FEAT) float32.  Returns dict of distribution means."""
    B = features.shape[0]
    img_flat, vec_pad = pl.pallas_call(
        _fused_decoder_kernel,
        grid=(1,),                    # single step; batch folded into matmul M dim
        in_specs=[_full_spec(features.shape),
                  _full_spec(params["wslab"].shape),
                  _full_spec(params["avg"].shape),
                  _full_spec(params["vslab"].shape)],
        out_specs=(_full_spec((B, IMG_FLAT)), _full_spec((B, VEC_PAD))),
        out_shape=(jax.ShapeDtypeStruct((B, IMG_FLAT), jnp.float32),
                   jax.ShapeDtypeStruct((B, VEC_PAD), jnp.float32)),
        compiler_params=pltpu.CompilerParams(dimension_semantics=("arbitrary",)),
    )(features, params["wslab"], params["avg"], params["vslab"])
    return {"image": img_flat.reshape(B, IMG_HW, IMG_HW, IMG_C),
            "vector": vec_pad[:, :VEC_DIM]}


# ----------------------------------------------------------------------------- #
# Pure numpy reference (exact PyTorch ConvTranspose2d / LayerNorm semantics).
# ----------------------------------------------------------------------------- #
def _reference_forward(features_np, raw):
    def ln(x, g, b):
        m = x.mean(axis=-1, keepdims=True)
        v = ((x - m) ** 2).mean(axis=-1, keepdims=True)
        return (x - m) / np.sqrt(v + LN_EPS) * g + b

    def silu(x):
        return x / (1.0 + np.exp(-x))

    def conv_t(x, w, bias=None):        # x NHWC, w (Cin, Cout, K, K), stride 2, pad 1
        Bn, H, W, _ = x.shape
        Cout, K = w.shape[1], w.shape[2]
        out = np.zeros((Bn, 2 * H, 2 * W, Cout), np.float64)
        for iy in range(H):
            for kh in range(K):
                oy = 2 * iy - 1 + kh
                if not 0 <= oy < 2 * H:
                    continue
                for ix in range(W):
                    for kw in range(K):
                        ox = 2 * ix - 1 + kw
                        if not 0 <= ox < 2 * W:
                            continue
                        out[:, oy, ox, :] += x[:, iy, ix, :] @ w[:, :, kh, kw]
        if bias is not None:
            out = out + bias
        return out

    f = features_np.astype(np.float64)
    s = f @ raw["wlin"] + raw["blin"]
    x0 = s.reshape(-1, MINRES, MINRES, C0_IN)
    h0 = silu(ln(conv_t(x0, raw["w0"]), raw["g0"], raw["be0"]))
    img = conv_t(h0, raw["w1"], raw["b1"])
    h = f
    for i in range(MLP_LAYERS):
        h = silu(ln(h @ raw[f"wm{i}"], raw[f"gm{i}"], raw[f"bem{i}"]))
    vec = h @ raw["wmean"] + raw["bmean"]
    return img, vec


if __name__ == "__main__":
    key = jax.random.PRNGKey(0)
    raw = init_params(key)
    params = prepare_params(raw)

    B = 2
    features = jax.random.normal(jax.random.fold_in(key, 999), (B, FEAT), jnp.float32)

    out = multi_decoder_forward(features, params)
    out = jax.block_until_ready(out)

    img = np.asarray(out["image"])
    vec = np.asarray(out["vector"])
    assert img.shape == (B, IMG_HW, IMG_HW, IMG_C), img.shape
    assert vec.shape == (B, VEC_DIM), vec.shape
    assert img.dtype == np.float32 and vec.dtype == np.float32

    ref_img, ref_vec = _reference_forward(np.asarray(features), raw)
    img_err = float(np.max(np.abs(img - ref_img)))
    vec_err = float(np.max(np.abs(vec - ref_vec)))
    assert img_err < 1e-1, f"image mismatch vs reference: max abs err {img_err}"
    assert vec_err < 8e-2, f"vector mismatch vs reference: max abs err {vec_err}"

    print("KERNEL_OK")
</pallas_src>

<mosaic_0001>
module attributes {stable_mosaic.version = 11 : i64} {
  func.func @_fused_decoder_kernel(%arg0: i32, %arg1: memref<2x32xf32, #tpu.memory_space<vmem>>, %arg2: memref<576x768xbf16, #tpu.memory_space<vmem>>, %arg3: memref<512x512xf32, #tpu.memory_space<vmem>>, %arg4: memref<8x768xf32, #tpu.memory_space<vmem>>, %arg5: memref<2x768xf32, #tpu.memory_space<vmem>>, %arg6: memref<2x128xf32, #tpu.memory_space<vmem>>) attributes {dimension_semantics = [#tpu.dimension_semantics<arbitrary>], iteration_bounds = array<i64: 1>, scalar_prefetch = 0 : i64, scratch_operands = 0 : i64, tpu.core_type = #tpu.core_type<tc>, window_params = [{pipeline_mode = #tpu.pipeline_mode<synchronous>, transform_indices = @transform_0, window_bounds = array<i64: 2, 32>}, {pipeline_mode = #tpu.pipeline_mode<synchronous>, transform_indices = @transform_1, window_bounds = array<i64: 576, 768>}, {pipeline_mode = #tpu.pipeline_mode<synchronous>, transform_indices = @transform_2, window_bounds = array<i64: 512, 512>}, {pipeline_mode = #tpu.pipeline_mode<synchronous>, transform_indices = @transform_3, window_bounds = array<i64: 8, 768>}, {pipeline_mode = #tpu.pipeline_mode<synchronous>, transform_indices = @transform_4, window_bounds = array<i64: 2, 768>}, {pipeline_mode = #tpu.pipeline_mode<synchronous>, transform_indices = @transform_5, window_bounds = array<i64: 2, 128>}]} {
    %c0 = arith.constant 0 : index
    %c0_0 = arith.constant 0 : index
    %0 = vector.load %arg1[%c0, %c0_0] : memref<2x32xf32, #tpu.memory_space<vmem>>, vector<2x32xf32>
    %1 = arith.truncf %0 : vector<2x32xf32> to vector<2x32xbf16>
    %c0_1 = arith.constant 0 : index
    %c0_2 = arith.constant 0 : index
    %2 = vector.load %arg2[%c0_1, %c0_2] : memref<576x768xbf16, #tpu.memory_space<vmem>>, vector<32x512xbf16>
    %c0_3 = arith.constant 0 : index
    %c0_4 = arith.constant 0 : index
    %3 = vector.load %arg4[%c0_3, %c0_4] : memref<8x768xf32, #tpu.memory_space<vmem>>, vector<1x512xf32>
    %cst = arith.constant dense<0.000000e+00> : vector<2x512xf32>
    %4 = tpu.matmul %1, %2, %cst {dimension_numbers = #tpu.dot_dimension_numbers<[1], [0], [0], [1], [0, 0, 1, 1], [], []>} : vector<2x32xbf16>, vector<32x512xbf16>, vector<2x512xf32> -> vector<2x512xf32>
    %5 = vector.broadcast %3 : vector<1x512xf32> to vector<2x512xf32>
    %6 = arith.addf %4, %5 : vector<2x512xf32>
    %c0_5 = arith.constant 0 : index
    %c0_6 = arith.constant 0 : index
    %7 = vector.load %arg3[%c0_5, %c0_6] : memref<512x512xf32, #tpu.memory_space<vmem>>, vector<512x512xf32>
    %cst_7 = arith.constant dense<0.000000e+00> : vector<2x512xf32>
    %8 = tpu.matmul %6, %7, %cst_7 {dimension_numbers = #tpu.dot_dimension_numbers<[1], [0], [0], [1], [0, 0, 1, 1], [], []>} : vector<2x512xf32>, vector<512x512xf32>, vector<2x512xf32> -> vector<2x512xf32>
    %9 = arith.subf %6, %8 : vector<2x512xf32>
    %10 = arith.mulf %9, %9 : vector<2x512xf32>
    %cst_8 = arith.constant dense<0.000000e+00> : vector<2x512xf32>
    %11 = tpu.matmul %10, %7, %cst_8 {dimension_numbers = #tpu.dot_dimension_numbers<[1], [0], [0], [1], [0, 0, 1, 1], [], []>} : vector<2x512xf32>, vector<512x512xf32>, vector<2x512xf32> -> vector<2x512xf32>
    %c1 = arith.constant 1 : index
    %c0_9 = arith.constant 0 : index
    %12 = vector.load %arg4[%c1, %c0_9] : memref<8x768xf32, #tpu.memory_space<vmem>>, vector<1x512xf32>
    %c2 = arith.constant 2 : index
    %c0_10 = arith.constant 0 : index
    %13 = vector.load %arg4[%c2, %c0_10] : memref<8x768xf32, #tpu.memory_space<vmem>>, vector<1x512xf32>
    %cst_11 = arith.constant 1.000000e-03 : f32
    %14 = vector.broadcast %cst_11 : f32 to vector<2x512xf32>
    %15 = arith.addf %11, %14 : vector<2x512xf32>
    %16 = math.rsqrt %15 : vector<2x512xf32>
    %17 = arith.mulf %9, %16 : vector<2x512xf32>
    %18 = vector.broadcast %12 : vector<1x512xf32> to vector<2x512xf32>
    %19 = arith.mulf %17, %18 : vector<2x512xf32>
    %20 = vector.broadcast %13 : vector<1x512xf32> to vector<2x512xf32>
    %21 = arith.addf %19, %20 : vector<2x512xf32>
    %22 = arith.negf %21 : vector<2x512xf32>
    %23 = math.exp %22 : vector<2x512xf32>
    %cst_12 = arith.constant 1.000000e+00 : f32
    %24 = vector.broadcast %cst_12 : f32 to vector<2x512xf32>
    %25 = arith.addf %24, %23 : vector<2x512xf32>
    %26 = arith.divf %24, %25 : vector<2x512xf32>
    %27 = arith.mulf %21, %26 : vector<2x512xf32>
    %c32 = arith.constant 32 : index
    %c0_13 = arith.constant 0 : index
    %28 = vector.load %arg2[%c32, %c0_13] : memref<576x768xbf16, #tpu.memory_space<vmem>>, vector<512x768xbf16>
    %c3 = arith.constant 3 : index
    %c0_14 = arith.constant 0 : index
    %29 = vector.load %arg4[%c3, %c0_14] : memref<8x768xf32, #tpu.memory_space<vmem>>, vector<1x768xf32>
    %30 = arith.truncf %27 : vector<2x512xf32> to vector<2x512xbf16>
    %cst_15 = arith.constant dense<0.000000e+00> : vector<2x768xf32>
    %31 = tpu.matmul %30, %28, %cst_15 {dimension_numbers = #tpu.dot_dimension_numbers<[1], [0], [0], [1], [0, 0, 1, 1], [], []>} : vector<2x512xbf16>, vector<512x768xbf16>, vector<2x768xf32> -> vector<2x768xf32>
    %32 = vector.broadcast %29 : vector<1x768xf32> to vector<2x768xf32>
    %33 = arith.addf %31, %32 : vector<2x768xf32>
    %c0_16 = arith.constant 0 : index
    %c0_17 = arith.constant 0 : index
    %34 = vector.load %arg5[%c0_16, %c0_17] : memref<2x768xf32, #tpu.memory_space<vmem>>, vector<2x768xf32>
    tpu.vector_store %arg5[%c0_16, %c0_17], %33 {strides = array<i32>} : memref<2x768xf32, #tpu.memory_space<vmem>>, vector<2x768xf32>,
    %c0_18 = arith.constant 0 : index
    %c512 = arith.constant 512 : index
    %35 = vector.load %arg2[%c0_18, %c512] : memref<576x768xbf16, #tpu.memory_space<vmem>>, vector<32x32xbf16>
    %c0_19 = arith.constant 0 : index
    %c640 = arith.constant 640 : index
    %36 = vector.load %arg2[%c0_19, %c640] : memref<576x768xbf16, #tpu.memory_space<vmem>>, vector<32x32xbf16>
    %c544 = arith.constant 544 : index
    %c0_20 = arith.constant 0 : index
    %37 = vector.load %arg2[%c544, %c0_20] : memref<576x768xbf16, #tpu.memory_space<vmem>>, vector<32x128xbf16>
    %c1_21 = arith.constant 1 : index
    %c512_22 = arith.constant 512 : index
    %38 = vector.load %arg4[%c1_21, %c512_22] : memref<8x768xf32, #tpu.memory_space<vmem>>, vector<1x32xf32>
    %c1_23 = arith.constant 1 : index
    %c640_24 = arith.constant 640 : index
    %39 = vector.load %arg4[%c1_23, %c640_24] : memref<8x768xf32, #tpu.memory_space<vmem>>, vector<1x32xf32>
    %c2_25 = arith.constant 2 : index
    %c512_26 = arith.constant 512 : index
    %40 = vector.load %arg4[%c2_25, %c512_26] : memref<8x768xf32, #tpu.memory_space<vmem>>, vector<1x32xf32>
    %c2_27 = arith.constant 2 : index
    %c640_28 = arith.constant 640 : index
    %41 = vector.load %arg4[%c2_27, %c640_28] : memref<8x768xf32, #tpu.memory_space<vmem>>, vector<1x32xf32>
    %c0_29 = arith.constant 0 : index
    %c512_30 = arith.constant 512 : index
    %42 = vector.load %arg4[%c0_29, %c512_30] : memref<8x768xf32, #tpu.memory_space<vmem>>, vector<1x128xf32>
    %cst_31 = arith.constant dense<0.000000e+00> : vector<2x32xf32>
    %43 = tpu.matmul %1, %35, %cst_31 {dimension_numbers = #tpu.dot_dimension_numbers<[1], [0], [0], [1], [0, 0, 1, 1], [], []>} : vector<2x32xbf16>, vector<32x32xbf16>, vector<2x32xf32> -> vector<2x32xf32>
    %cst_32 = arith.constant dense<0.000000e+00> : vector<2xf32>
    %44 = vector.multi_reduction <add>, %43, %cst_32 [1] : vector<2x32xf32> to vector<2xf32>
    %45 = vector.shape_cast %44 : vector<2xf32> to vector<2x1xf32>
    %cst_33 = arith.constant 3.200000e+01 : f32
    %46 = vector.broadcast %cst_33 : f32 to vector<2x1xf32>
    %47 = arith.divf %45, %46 : vector<2x1xf32>
    %48 = vector.broadcast %47 : vector<2x1xf32> to vector<2x32xf32>
    %49 = arith.subf %43, %48 : vector<2x32xf32>
    %50 = arith.mulf %49, %49 : vector<2x32xf32>
    %cst_34 = arith.constant dense<0.000000e+00> : vector<2xf32>
    %51 = vector.multi_reduction <add>, %50, %cst_34 [1] : vector<2x32xf32> to vector<2xf32>
    %52 = vector.shape_cast %51 : vector<2xf32> to vector<2x1xf32>
    %cst_35 = arith.constant 3.200000e+01 : f32
    %53 = vector.broadcast %cst_35 : f32 to vector<2x1xf32>
    %54 = arith.divf %52, %53 : vector<2x1xf32>
    %cst_36 = arith.constant 1.000000e-03 : f32
    %55 = vector.broadcast %cst_36 : f32 to vector<2x1xf32>
    %56 = arith.addf %54, %55 : vector<2x1xf32>
    %57 = math.rsqrt %56 : vector<2x1xf32>
    %58 = vector.broadcast %57 : vector<2x1xf32> to vector<2x32xf32>
    %59 = arith.mulf %49, %58 : vector<2x32xf32>
    %60 = vector.broadcast %38 : vector<1x32xf32> to vector<2x32xf32>
    %61 = arith.mulf %59, %60 : vector<2x32xf32>
    %62 = vector.broadcast %39 : vector<1x32xf32> to vector<2x32xf32>
    %63 = arith.addf %61, %62 : vector<2x32xf32>
    %64 = arith.negf %63 : vector<2x32xf32>
    %65 = math.exp %64 : vector<2x32xf32>
    %cst_37 = arith.constant 1.000000e+00 : f32
    %66 = vector.broadcast %cst_37 : f32 to vector<2x32xf32>
    %67 = arith.addf %66, %65 : vector<2x32xf32>
    %68 = arith.divf %66, %67 : vector<2x32xf32>
    %69 = arith.mulf %63, %68 : vector<2x32xf32>
    %70 = arith.truncf %69 : vector<2x32xf32> to vector<2x32xbf16>
    %cst_38 = arith.constant dense<0.000000e+00> : vector<2x32xf32>
    %71 = tpu.matmul %70, %36, %cst_38 {dimension_numbers = #tpu.dot_dimension_numbers<[1], [0], [0], [1], [0, 0, 1, 1], [], []>} : vector<2x32xbf16>, vector<32x32xbf16>, vector<2x32xf32> -> vector<2x32xf32>
    %cst_39 = arith.constant dense<0.000000e+00> : vector<2xf32>
    %72 = vector.multi_reduction <add>, %71, %cst_39 [1] : vector<2x32xf32> to vector<2xf32>
    %73 = vector.shape_cast %72 : vector<2xf32> to vector<2x1xf32>
    %cst_40 = arith.constant 3.200000e+01 : f32
    %74 = vector.broadcast %cst_40 : f32 to vector<2x1xf32>
    %75 = arith.divf %73, %74 : vector<2x1xf32>
    %76 = vector.broadcast %75 : vector<2x1xf32> to vector<2x32xf32>
    %77 = arith.subf %71, %76 : vector<2x32xf32>
    %78 = arith.mulf %77, %77 : vector<2x32xf32>
    %cst_41 = arith.constant dense<0.000000e+00> : vector<2xf32>
    %79 = vector.multi_reduction <add>, %78, %cst_41 [1] : vector<2x32xf32> to vector<2xf32>
    %80 = vector.shape_cast %79 : vector<2xf32> to vector<2x1xf32>
    %cst_42 = arith.constant 3.200000e+01 : f32
    %81 = vector.broadcast %cst_42 : f32 to vector<2x1xf32>
    %82 = arith.divf %80, %81 : vector<2x1xf32>
    %cst_43 = arith.constant 1.000000e-03 : f32
    %83 = vector.broadcast %cst_43 : f32 to vector<2x1xf32>
    %84 = arith.addf %82, %83 : vector<2x1xf32>
    %85 = math.rsqrt %84 : vector<2x1xf32>
    %86 = vector.broadcast %85 : vector<2x1xf32> to vector<2x32xf32>
    %87 = arith.mulf %77, %86 : vector<2x32xf32>
    %88 = vector.broadcast %40 : vector<1x32xf32> to vector<2x32xf32>
    %89 = arith.mulf %87, %88 : vector<2x32xf32>
    %90 = vector.broadcast %41 : vector<1x32xf32> to vector<2x32xf32>
    %91 = arith.addf %89, %90 : vector<2x32xf32>
    %92 = arith.negf %91 : vector<2x32xf32>
    %93 = math.exp %92 : vector<2x32xf32>
    %cst_44 = arith.constant 1.000000e+00 : f32
    %94 = vector.broadcast %cst_44 : f32 to vector<2x32xf32>
    %95 = arith.addf %94, %93 : vector<2x32xf32>
    %96 = arith.divf %94, %95 : vector<2x32xf32>
    %97 = arith.mulf %91, %96 : vector<2x32xf32>
    %98 = arith.truncf %97 : vector<2x32xf32> to vector<2x32xbf16>
    %cst_45 = arith.constant dense<0.000000e+00> : vector<2x128xf32>
    %99 = tpu.matmul %98, %37, %cst_45 {dimension_numbers = #tpu.dot_dimension_numbers<[1], [0], [0], [1], [0, 0, 1, 1], [], []>} : vector<2x32xbf16>, vector<32x128xbf16>, vector<2x128xf32> -> vector<2x128xf32>
    %100 = vector.broadcast %42 : vector<1x128xf32> to vector<2x128xf32>
    %101 = arith.addf %99, %100 : vector<2x128xf32>
    %c0_46 = arith.constant 0 : index
    %c0_47 = arith.constant 0 : index
    %102 = vector.load %arg6[%c0_46, %c0_47] : memref<2x128xf32, #tpu.memory_space<vmem>>, vector<2x128xf32>
    tpu.vector_store %arg6[%c0_46, %c0_47], %101 {strides = array<i32>} : memref<2x128xf32, #tpu.memory_space<vmem>>, vector<2x128xf32>,
    return
  }
  func.func @transform_0(%arg0: i32) -> (i32, i32) {
    %c0_i32 = arith.constant 0 : i32
    %c0_i32_0 = arith.constant 0 : i32
    %c0_i32_1 = arith.constant 0 : i32
    return %c0_i32, %c0_i32_0 : i32, i32
  }
  func.func @transform_1(%arg0: i32) -> (i32, i32) {
    %c0_i32 = arith.constant 0 : i32
    %c0_i32_0 = arith.constant 0 : i32
    %c0_i32_1 = arith.constant 0 : i32
    return %c0_i32, %c0_i32_0 : i32, i32
  }
  func.func @transform_2(%arg0: i32) -> (i32, i32) {
    %c0_i32 = arith.constant 0 : i32
    %c0_i32_0 = arith.constant 0 : i32
    %c0_i32_1 = arith.constant 0 : i32
    return %c0_i32, %c0_i32_0 : i32, i32
  }
  func.func @transform_3(%arg0: i32) -> (i32, i32) {
    %c0_i32 = arith.constant 0 : i32
    %c0_i32_0 = arith.constant 0 : i32
    %c0_i32_1 = arith.constant 0 : i32
    return %c0_i32, %c0_i32_0 : i32, i32
  }
  func.func @transform_4(%arg0: i32) -> (i32, i32) {
    %c0_i32 = arith.constant 0 : i32
    %c0_i32_0 = arith.constant 0 : i32
    %c0_i32_1 = arith.constant 0 : i32
    return %c0_i32, %c0_i32_0 : i32, i32
  }
  func.func @transform_5(%arg0: i32) -> (i32, i32) {
    %c0_i32 = arith.constant 0 : i32
    %c0_i32_0 = arith.constant 0 : i32
    %c0_i32_1 = arith.constant 0 : i32
    return %c0_i32, %c0_i32_0 : i32, i32
  }
}

</mosaic_0001>

<llo_original>
// kernel: multi_decoder_forward.1
$region0: #{multi_decoder_forward.1}
  #allocation0 [shape = 'u32[]', space=smem, size = 0x4, offset = 0x4, fixed_abs, tag = 'smem constant byte address 0x4 - core index']
  #allocation1 [shape = 'u32[144,128]{1,0:T(1,128)}', space=vmem, size = 0x12000, scoped, tag = 'internal scratch']
  %s0 = inlined_call_operand.hbm [shape: f32[2,32], index: 0, kind: input, shape index: {}]
  %s1 = inlined_call_operand.hbm [shape: bf16[576,768], index: 1, kind: input, shape index: {}]
  %s2 = inlined_call_operand.hbm [shape: f32[512,512], index: 2, kind: input, shape index: {}]
  %s3 = inlined_call_operand.hbm [shape: f32[8,768], index: 3, kind: input, shape index: {}]
  %s4 = inlined_call_operand.vmem [shape: f32[2,768], index: 4, kind: output, shape index: {0}]
  %s5 = inlined_call_operand.hbm [shape: f32[2,128], index: 5, kind: output, shape index: {1}]
  %6 = xla_tuple %s4, %s5
  %s7 = sld [smem:[#allocation0]]
  $region50: #{multi_decoder_forward.1} parent=0
    _
  %s9 = ssub.s32 1, %s7
  %s10 = scalar_select 0, %s9, %s7
  $region1: #{multi_decoder_forward.1} parent=0
    #allocation2 [shape = 'u8[1024]{0}', space=vmem, size = 0x400, scoped, tag = 'input window, operand 0, single buffered']
    #allocation3 [shape = 's32[1]{0}', space=sflag, size = 0x4, scoped, tag = 'scoped memory for multi_decoder_forward.1']
    #allocation4 [shape = 's32[1]{0}', space=sflag, size = 0x4, scoped, tag = 'scoped memory for multi_decoder_forward.1']
    #allocation5 [shape = 'u8[884736]{0}', space=vmem, size = 0xd8000, scoped, tag = 'input window, operand 1, single buffered']
    #allocation6 [shape = 's32[1]{0}', space=sflag, size = 0x4, scoped, tag = 'scoped memory for multi_decoder_forward.1']
    #allocation7 [shape = 'u8[1048576]{0}', space=vmem, size = 0x100000, scoped, tag = 'input window, operand 2, single buffered']
    #allocation8 [shape = 'u8[24576]{0}', space=vmem, size = 0x6000, scoped, tag = 'input window, operand 3, single buffered']
    #allocation9 [shape = 's32[1]{0}', space=sflag, size = 0x4, scoped, tag = 'scoped memory for multi_decoder_forward.1']
    #allocation10 [shape = 'u8[1024]{0}', space=vmem, size = 0x400, scoped, tag = 'output window, operand 1, single buffered']
    %11 = vsyncpa [#allocation3], 0
    %12 = vsyncpa [#allocation6], 0
    %13 = vsyncpa [#allocation9], 0
    %14 = vsyncpa [#allocation4], 0
    // Predicated region
    $region2: #{multi_decoder_forward.1} parent=1 // pred_check
      _
    $region3: #{multi_decoder_forward.1} parent=1 // pred_check_branch
      %16 = sbr.rel (0) target = $region5
    $region4: #{multi_decoder_forward.1} parent=1 // pred_region
      %s18 = ssub.s32 32, 32
      %19 = vsyncadd [#allocation3], %s18
      %s21 = sshll.u32 [#allocation2], 4
      %s22 = int_to_ptr.vmem [resolvable:$true] %s21
      %24 = dma.hbm_to_vmem [thread:$0]  %s0, 32, %s22, [#allocation3]
    $region5: #{multi_decoder_forward.1} parent=1 // pred_fallthru
      _
    // Predicated region
    $region6: #{multi_decoder_forward.1} parent=1 // pred_check
      _
    $region7: #{multi_decoder_forward.1} parent=1 // pred_check_branch
      %26 = sbr.rel (0) target = $region9
    $region8: #{multi_decoder_forward.1} parent=1 // pred_region
      %s28 = ssub.s32 27648, 27648
      %29 = vsyncadd [#allocation6], %s28
      %s30 = sshll.u32 [#allocation5], 4
      %s31 = int_to_ptr.vmem [resolvable:$true] %s30
      %36 = dma.hbm_to_vmem [thread:$0]  %s1, 27648, %s31, [#allocation6], 384, 384, 24
    $region9: #{multi_decoder_forward.1} parent=1 // pred_fallthru
      _
    // Predicated region
    $region10: #{multi_decoder_forward.1} parent=1 // pred_check
      _
    $region11: #{multi_decoder_forward.1} parent=1 // pred_check_branch
      %38 = sbr.rel (0) target = $region13
    $region12: #{multi_decoder_forward.1} parent=1 // pred_region
      %s40 = ssub.s32 32768, 32768
      %41 = vsyncadd [#allocation6], %s40
      %s42 = sshll.u32 [#allocation7], 4
      %s43 = int_to_ptr.vmem [resolvable:$true] %s42
      %48 = dma.hbm_to_vmem [thread:$0]  %s2, 32768, %s43, [#allocation6], 512, 512, 32
    $region13: #{multi_decoder_forward.1} parent=1 // pred_fallthru
      _
    // Predicated region
    $region14: #{multi_decoder_forward.1} parent=1 // pred_check
      _
    $region15: #{multi_decoder_forward.1} parent=1 // pred_check_branch
      %50 = sbr.rel (0) target = $region17
    $region16: #{multi_decoder_forward.1} parent=1 // pred_region
      %s52 = ssub.s32 768, 768
      %53 = vsyncadd [#allocation9], %s52
      %s55 = sshll.u32 [#allocation8], 4
      %s56 = int_to_ptr.vmem [resolvable:$true] %s55
      %58 = dma.hbm_to_vmem [thread:$0]  %s3, 768, %s56, [#allocation9]
    $region17: #{multi_decoder_forward.1} parent=1 // pred_fallthru
      _
    // Predicated region
    $region18: #{multi_decoder_forward.1} parent=1 // pred_check
      _
    $region19: #{multi_decoder_forward.1} parent=1 // pred_check_branch
      %60 = sbr.rel (0) target = $region21
    $region20: #{multi_decoder_forward.1} parent=1 // pred_region
      %61 = dma.done [#allocation3], 32
    $region21: #{multi_decoder_forward.1} parent=1 // pred_fallthru
      _
    // Predicated region
    $region22: #{multi_decoder_forward.1} parent=1 // pred_check
      _
    $region23: #{multi_decoder_forward.1} parent=1 // pred_check_branch
      %63 = sbr.rel (0) target = $region25
    $region24: #{multi_decoder_forward.1} parent=1 // pred_region
      %64 = dma.done [#allocation6], 27648
    $region25: #{multi_decoder_forward.1} parent=1 // pred_fallthru
      _
    // Predicated region
    $region26: #{multi_decoder_forward.1} parent=1 // pred_check
      _
    $region27: #{multi_decoder_forward.1} parent=1 // pred_check_branch
      %66 = sbr.rel (0) target = $region29
    $region28: #{multi_decoder_forward.1} parent=1 // pred_region
      %67 = dma.done [#allocation6], 32768
    $region29: #{multi_decoder_forward.1} parent=1 // pred_fallthru
      _
    // Predicated region
    $region30: #{multi_decoder_forward.1} parent=1 // pred_check
      _
    $region31: #{multi_decoder_forward.1} parent=1 // pred_check_branch
      %69 = sbr.rel (0) target = $region33
    $region32: #{multi_decoder_forward.1} parent=1 // pred_region
      %70 = dma.done [#allocation9], 768
    $region33: #{multi_decoder_forward.1} parent=1 // pred_fallthru
      _
    %v72 = vld [vmem:[#allocation2] sm:$0x3]
    %v73 = vpack.c.bf16 %v72, %v72
    %v74 = vld [vmem:[#allocation5] sm:$0xff]
    %v75 = vld [vmem:[#allocation5 + $0x8] sm:$0xff]
    %v76 = vld [vmem:[#allocation5 + $0x18] sm:$0xff]
    %v77 = vld [vmem:[#allocation5 + $0x20] sm:$0xff]
    %v78 = vld [vmem:[#allocation5 + $0x30] sm:$0xff]
    %v79 = vld [vmem:[#allocation5 + $0x38] sm:$0xff]
    %v80 = vld [vmem:[#allocation5 + $0x48] sm:$0xff]
    %v81 = vld [vmem:[#allocation5 + $0x50] sm:$0xff]
    %v82 = vld [vmem:[#allocation8] ss:$8 sm:$0xf]
    %v84 = vlaneseq
    %v85 = vshrl.u32 %v84, 7
    %v86 = vsub.s32 0, %v85
    %v87 = vrot.slane %v82, %v86
    %v88 = vlaneseq
    %v89 = vshrl.u32 %v88, 7
    %v90 = vsub.s32 1, %v89
    %v91 = vrot.slane %v82, %v90
    %v92 = vlaneseq
    %v93 = vshrl.u32 %v92, 7
    %v94 = vsub.s32 2, %v93
    %v95 = vrot.slane %v82, %v94
    %v96 = vlaneseq
    %v97 = vshrl.u32 %v96, 7
    %v98 = vsub.s32 3, %v97
    %v99 = vrot.slane %v82, %v98
    %v112 = vunpack.c.l.b16 %v74
    %v113 = vunpack.c.h.b16 %v74
    %v114 = vunpack.c.l.b16 %v75
    %v115 = vunpack.c.h.b16 %v75
    %v116 = vunpack.c.l.b16 %v76
    %v117 = vunpack.c.h.b16 %v76
    %v118 = vunpack.c.l.b16 %v77
    %v119 = vunpack.c.h.b16 %v77
    %v120 = vunpack.c.l.b16 %v78
    %v121 = vunpack.c.h.b16 %v78
    %v122 = vunpack.c.l.b16 %v79
    %v123 = vunpack.c.h.b16 %v79
    %v124 = vunpack.c.l.b16 %v80
    %v125 = vunpack.c.h.b16 %v80
    %v126 = vunpack.c.l.b16 %v81
    %v127 = vunpack.c.h.b16 %v81
    %v128 = vpack.c.b16 %v116, %v112
    %v129 = vpack.c.b16 %v117, %v113
    %v130 = vpack.c.b16 %v118, %v114
    %v131 = vpack.c.b16 %v119, %v115
    %v132 = vpack.c.b16 %v124, %v120
    %v133 = vpack.c.b16 %v125, %v121
    %v134 = vpack.c.b16 %v126, %v122
    %v135 = vpack.c.b16 %v127, %v123
    %vm144 = vcmask 261120
    %v146 = vsel %vm144, %v73, 0
    %148 = vmatprep.subr.bf16.mxu0 0
    %149 = vmatpush1.bf16.msra.mxu0 0
    %150 = vmatprep.subr.bf16.mxu0 0
    %151 = vmatpush1.bf16.msra.mxu0 0
    %152 = vmatprep.subr.bf16.mxu0 0
    %153 = vmatpush1.bf16.msra.mxu0 0
    %154 = vmatprep.subr.bf16.mxu0 0
    %155 = vmatpush1.bf16.msra.mxu0 0
    %156 = vmatprep.subr.bf16.mxu0 0
    %157 = vmatpush1.bf16.msra.mxu0 0
    %158 = vmatprep.subr.bf16.mxu0 0
    %159 = vmatpush1.bf16.msra.mxu0 0
    %160 = vmatprep.subr.bf16.mxu0 %v133
    %161 = vmatpush1.bf16.msra.mxu0 %v132
    %162 = vmatprep.subr.bf16.mxu0 %v129
    %163 = vmatpush1.bf16.msra.mxu0 %v128
    %164 = vmatprep.subr.bf16.mxu0 0
    %165 = vmatpush2.bf16.msra.mxu0 0
    %166 = vmatprep.subr.bf16.mxu0 0
    %167 = vmatpush2.bf16.msra.mxu0 0
    %168 = vmatprep.subr.bf16.mxu0 0
    %169 = vmatpush2.bf16.msra.mxu0 0
    %170 = vmatprep.subr.bf16.mxu0 0
    %171 = vmatpush2.bf16.msra.mxu0 0
    %172 = vmatprep.subr.bf16.mxu0 0
    %173 = vmatpush2.bf16.msra.mxu0 0
    %174 = vmatprep.subr.bf16.mxu0 0
    %175 = vmatpush2.bf16.msra.mxu0 0
    %176 = vmatprep.subr.bf16.mxu0 0
    %177 = vmatpush2.bf16.msra.mxu0 0
    %178 = vmatprep.subr.bf16.mxu0 0
    %179 = vmatpush2.bf16.msra.mxu0 0
    %180 = vmatprep.mubr.bf16.mxu0 0
    %181 = vmatmul.mubr.bf16.gmra.mxu0 %v146
    %v182 = vpop.f32.mrf.mxu0
    %v183 = vadd.f32 %v87, %v182
    %v184 = vpop.f32.mrf.mxu0
    %v185 = vadd.f32 %v91, %v184
    %v186 = vpop.f32.mrf.mxu0
    %v187 = vpop.f32.mrf.mxu0
    %188 = vdwg.mxu0
    %189 = vmatprep.subr.bf16.mxu0 0
    %190 = vmatpush1.bf16.msra.mxu0 0
    %191 = vmatprep.subr.bf16.mxu0 0
    %192 = vmatpush1.bf16.msra.mxu0 0
    %193 = vmatprep.subr.bf16.mxu0 0
    %194 = vmatpush1.bf16.msra.mxu0 0
    %195 = vmatprep.subr.bf16.mxu0 0
    %196 = vmatpush1.bf16.msra.mxu0 0
    %197 = vmatprep.subr.bf16.mxu0 0
    %198 = vmatpush1.bf16.msra.mxu0 0
    %199 = vmatprep.subr.bf16.mxu0 0
    %200 = vmatpush1.bf16.msra.mxu0 0
    %201 = vmatprep.subr.bf16.mxu0 %v135
    %202 = vmatpush1.bf16.msra.mxu0 %v134
    %203 = vmatprep.subr.bf16.mxu0 %v131
    %204 = vmatpush1.bf16.msra.mxu0 %v130
    %205 = vmatprep.subr.bf16.mxu0 0
    %206 = vmatpush2.bf16.msra.mxu0 0
    %207 = vmatprep.subr.bf16.mxu0 0
    %208 = vmatpush2.bf16.msra.mxu0 0
    %209 = vmatprep.subr.bf16.mxu0 0
    %210 = vmatpush2.bf16.msra.mxu0 0
    %211 = vmatprep.subr.bf16.mxu0 0
    %212 = vmatpush2.bf16.msra.mxu0 0
    %213 = vmatprep.subr.bf16.mxu0 0
    %214 = vmatpush2.bf16.msra.mxu0 0
    %215 = vmatprep.subr.bf16.mxu0 0
    %216 = vmatpush2.bf16.msra.mxu0 0
    %217 = vmatprep.subr.bf16.mxu0 0
    %218 = vmatpush2.bf16.msra.mxu0 0
    %219 = vmatprep.subr.bf16.mxu0 0
    %220 = vmatpush2.bf16.msra.mxu0 0
    %221 = vmatprep.mubr.bf16.mxu0 0
    %222 = vmatmul.mubr.bf16.gmra.mxu0 %v146
    %v223 = vpop.f32.mrf.mxu0
    %v224 = vadd.f32 %v95, %v223
    %v225 = vpop.f32.mrf.mxu0
    %v226 = vadd.f32 %v99, %v225
    %v227 = vpop.f32.mrf.mxu0
    %v228 = vpop.f32.mrf.mxu0
    %229 = vdwg.mxu0
    %v230 = vld [vmem:[#allocation7] sm:$0xff]
    %v231 = vld [vmem:[#allocation7 + $0x8] sm:$0xff]
    %v232 = vld [vmem:[#allocation7 + $0x10] sm:$0xff]
    %v233 = vld [vmem:[#allocation7 + $0x18] sm:$0xff]
    %v234 = vld [vmem:[#allocation7 + $0x20] sm:$0xff]
    %v235 = vld [vmem:[#allocation7 + $0x28] sm:$0xff]
    %v236 = vld [vmem:[#allocation7 + $0x30] sm:$0xff]
    %v237 = vld [vmem:[#allocation7 + $0x38] sm:$0xff]
    %v238 = vld [vmem:[#allocation7 + $0x40] sm:$0xff]
    %v239 = vld [vmem:[#allocation7 + $0x48] sm:$0xff]
    %v240 = vld [vmem:[#allocation7 + $0x50] sm:$0xff]
    %v241 = vld [vmem:[#allocation7 + $0x58] sm:$0xff]
    %v242 = vld [vmem:[#allocation7 + $0x60] sm:$0xff]
    %v243 = vld [vmem:[#allocation7 + $0x68] sm:$0xff]
    %v244 = vld [vmem:[#allocation7 + $0x70] sm:$0xff]
    %v245 = vld [vmem:[#allocation7 + $0x78] sm:$0xff]
    %v246 = vld [vmem:[#allocation7 + $0x80] sm:$0xff]
    %v247 = vld [vmem:[#allocation7 + $0x88] sm:$0xff]
    %v248 = vld [vmem:[#allocation7 + $0x90] sm:$0xff]
    %v249 = vld [vmem:[#allocation7 + $0x98] sm:$0xff]
    %v250 = vld [vmem:[#allocation7 + $0xa0] sm:$0xff]
    %v251 = vld [vmem:[#allocation7 + $0xa8] sm:$0xff]
    %v252 = vld [vmem:[#allocation7 + $0xb0] sm:$0xff]
    %v253 = vld [vmem:[#allocation7 + $0xb8] sm:$0xff]
    %v254 = vld [vmem:[#allocation7 + $0xc0] sm:$0xff]
    %v255 = vld [vmem:[#allocation7 + $0xc8] sm:$0xff]
    %v256 = vld [vmem:[#allocation7 + $0xd0] sm:$0xff]
    %v257 = vld [vmem:[#allocation7 + $0xd8] sm:$0xff]
    %v258 = vld [vmem:[#allocation7 + $0xe0] sm:$0xff]
    %v259 = vld [vmem:[#allocation7 + $0xe8] sm:$0xff]
    %v260 = vld [vmem:[#allocation7 + $0xf0] sm:$0xff]
    %v261 = vld [vmem:[#allocation7 + $0xf8] sm:$0xff]
    %v262 = vld [vmem:[#allocation7 + $0x100] sm:$0xff]
    %v263 = vld [vmem:[#allocation7 + $0x108] sm:$0xff]
    %v264 = vld [vmem:[#allocation7 + $0x110] sm:$0xff]
    %v265 = vld [vmem:[#allocation7 + $0x118] sm:$0xff]
    %v266 = vld [vmem:[#allocation7 + $0x120] sm:$0xff]
    %v267 = vld [vmem:[#allocation7 + $0x128] sm:$0xff]
    %v268 = vld [vmem:[#allocation7 + $0x130] sm:$0xff]
    %v269 = vld [vmem:[#allocation7 + $0x138] sm:$0xff]
    %v270 = vld [vmem:[#allocation7 + $0x140] sm:$0xff]
    %v271 = vld [vmem:[#allocation7 + $0x148] sm:$0xff]
    %v272 = vld [vmem:[#allocation7 + $0x150] sm:$0xff]
    %v273 = vld [vmem:[#allocation7 + $0x158] sm:$0xff]
    %v274 = vld [vmem:[#allocation7 + $0x160] sm:$0xff]
    %v275 = vld [vmem:[#allocation7 + $0x168] sm:$0xff]
    %v276 = vld [vmem:[#allocation7 + $0x170] sm:$0xff]
    %v277 = vld [vmem:[#allocation7 + $0x178] sm:$0xff]
    %v278 = vld [vmem:[#allocation7 + $0x180] sm:$0xff]
    %v279 = vld [vmem:[#allocation7 + $0x188] sm:$0xff]
    %v280 = vld [vmem:[#allocation7 + $0x190] sm:$0xff]
    %v281 = vld [vmem:[#allocation7 + $0x198] sm:$0xff]
    %v282 = vld [vmem:[#allocation7 + $0x1a0] sm:$0xff]
    %v283 = vld [vmem:[#allocation7 + $0x1a8] sm:$0xff]
    %v284 = vld [vmem:[#allocation7 + $0x1b0] sm:$0xff]
    %v285 = vld [vmem:[#allocation7 + $0x1b8] sm:$0xff]
    %v286 = vld [vmem:[#allocation7 + $0x1c0] sm:$0xff]
    %v287 = vld [vmem:[#allocation7 + $0x1c8] sm:$0xff]
    %v288 = vld [vmem:[#allocation7 + $0x1d0] sm:$0xff]
    %v289 = vld [vmem:[#allocation7 + $0x1d8] sm:$0xff]
    %v290 = vld [vmem:[#allocation7 + $0x1e0] sm:$0xff]
    %v291 = vld [vmem:[#allocation7 + $0x1e8] sm:$0xff]
    %v292 = vld [vmem:[#allocation7 + $0x1f0] sm:$0xff]
    %v293 = vld [vmem:[#allocation7 + $0x1f8] sm:$0xff]
    %v294 = vld [vmem:[#allocation7 + $0x200] sm:$0xff]
    %v295 = vld [vmem:[#allocation7 + $0x208] sm:$0xff]
    %v296 = vld [vmem:[#allocation7 + $0x210] sm:$0xff]
    %v297 = vld [vmem:[#allocation7 + $0x218] sm:$0xff]
    %v298 = vld [vmem:[#allocation7 + $0x220] sm:$0xff]
    %v299 = vld [vmem:[#allocation7 + $0x228] sm:$0xff]
    %v300 = vld [vmem:[#allocation7 + $0x230] sm:$0xff]
    %v301 = vld [vmem:[#allocation7 + $0x238] sm:$0xff]
    %v302 = vld [vmem:[#allocation7 + $0x240] sm:$0xff]
    %v303 = vld [vmem:[#allocation7 + $0x248] sm:$0xff]
    %v304 = vld [vmem:[#allocation7 + $0x250] sm:$0xff]
    %v305 = vld [vmem:[#allocation7 + $0x258] sm:$0xff]
    %v306 = vld [vmem:[#allocation7 + $0x260] sm:$0xff]
    %v307 = vld [vmem:[#allocation7 + $0x268] sm:$0xff]
    %v308 = vld [vmem:[#allocation7 + $0x270] sm:$0xff]
    %v309 = vld [vmem:[#allocation7 + $0x278] sm:$0xff]
    %v310 = vld [vmem:[#allocation7 + $0x280] sm:$0xff]
    %v311 = vld [vmem:[#allocation7 + $0x288] sm:$0xff]
    %v312 = vld [vmem:[#allocation7 + $0x290] sm:$0xff]
    %v313 = vld [vmem:[#allocation7 + $0x298] sm:$0xff]
    %v314 = vld [vmem:[#allocation7 + $0x2a0] sm:$0xff]
    %v315 = vld [vmem:[#allocation7 + $0x2a8] sm:$0xff]
    %v316 = vld [vmem:[#allocation7 + $0x2b0] sm:$0xff]
    %v317 = vld [vmem:[#allocation7 + $0x2b8] sm:$0xff]
    %v318 = vld [vmem:[#allocation7 + $0x2c0] sm:$0xff]
    %v319 = vld [vmem:[#allocation7 + $0x2c8] sm:$0xff]
    %v320 = vld [vmem:[#allocation7 + $0x2d0] sm:$0xff]
    %v321 = vld [vmem:[#allocation7 + $0x2d8] sm:$0xff]
    %v322 = vld [vmem:[#allocation7 + $0x2e0] sm:$0xff]
    %v323 = vld [vmem:[#allocation7 + $0x2e8] sm:$0xff]
    %v324 = vld [vmem:[#allocation7 + $0x2f0] sm:$0xff]
    %v325 = vld [vmem:[#allocation7 + $0x2f8] sm:$0xff]
    %v326 = vld [vmem:[#allocation7 + $0x300] sm:$0xff]
    %v327 = vld [vmem:[#allocation7 + $0x308] sm:$0xff]
    %v328 = vld [vmem:[#allocation7 + $0x310] sm:$0xff]
    %v329 = vld [vmem:[#allocation7 + $0x318] sm:$0xff]
    %v330 = vld [vmem:[#allocation7 + $0x320] sm:$0xff]
    %v331 = vld [vmem:[#allocation7 + $0x328] sm:$0xff]
    %v332 = vld [vmem:[#allocation7 + $0x330] sm:$0xff]
    %v333 = vld [vmem:[#allocation7 + $0x338] sm:$0xff]
    %v334 = vld [vmem:[#allocation7 + $0x340] sm:$0xff]
    %v335 = vld [vmem:[#allocation7 + $0x348] sm:$0xff]
    %v336 = vld [vmem:[#allocation7 + $0x350] sm:$0xff]
    %v337 = vld [vmem:[#allocation7 + $0x358] sm:$0xff]
    %v338 = vld [vmem:[#allocation7 + $0x360] sm:$0xff]
    %v339 = vld [vmem:[#allocation7 + $0x368] sm:$0xff]
    %v340 = vld [vmem:[#allocation7 + $0x370] sm:$0xff]
    %v341 = vld [vmem:[#allocation7 + $0x378] sm:$0xff]
    %v342 = vld [vmem:[#allocation7 + $0x380] sm:$0xff]
    %v343 = vld [vmem:[#allocation7 + $0x388] sm:$0xff]
    %v344 = vld [vmem:[#allocation7 + $0x390] sm:$0xff]
    %v345 = vld [vmem:[#allocation7 + $0x398] sm:$0xff]
    %v346 = vld [vmem:[#allocation7 + $0x3a0] sm:$0xff]
    %v347 = vld [vmem:[#allocation7 + $0x3a8] sm:$0xff]
    %v348 = vld [vmem:[#allocation7 + $0x3b0] sm:$0xff]
    %v349 = vld [vmem:[#allocation7 + $0x3b8] sm:$0xff]
    %v350 = vld [vmem:[#allocation7 + $0x3c0] sm:$0xff]
    %v351 = vld [vmem:[#allocation7 + $0x3c8] sm:$0xff]
    %v352 = vld [vmem:[#allocation7 + $0x3d0] sm:$0xff]
    %v353 = vld [vmem:[#allocation7 + $0x3d8] sm:$0xff]
    %v354 = vld [vmem:[#allocation7 + $0x3e0] sm:$0xff]
    %v355 = vld [vmem:[#allocation7 + $0x3e8] sm:$0xff]
    %v356 = vld [vmem:[#allocation7 + $0x3f0] sm:$0xff]
    %v357 = vld [vmem:[#allocation7 + $0x3f8] sm:$0xff]
    %v358 = vld [vmem:[#allocation7 + $0x400] sm:$0xff]
    %v359 = vld [vmem:[#allocation7 + $0x408] sm:$0xff]
    %v360 = vld [vmem:[#allocation7 + $0x410] sm:$0xff]
    %v361 = vld [vmem:[#allocation7 + $0x418] sm:$0xff]
    %v362 = vld [vmem:[#allocation7 + $0x420] sm:$0xff]
    %v363 = vld [vmem:[#allocation7 + $0x428] sm:$0xff]
    %v364 = vld [vmem:[#allocation7 + $0x430] sm:$0xff]
    %v365 = vld [vmem:[#allocation7 + $0x438] sm:$0xff]
    %v366 = vld [vmem:[#allocation7 + $0x440] sm:$0xff]
    %v367 = vld [vmem:[#allocation7 + $0x448] sm:$0xff]
    %v368 = vld [vmem:[#allocation7 + $0x450] sm:$0xff]
    %v369 = vld [vmem:[#allocation7 + $0x458] sm:$0xff]
    %v370 = vld [vmem:[#allocation7 + $0x460] sm:$0xff]
    %v371 = vld [vmem:[#allocation7 + $0x468] sm:$0xff]
    %v372 = vld [vmem:[#allocation7 + $0x470] sm:$0xff]
    %v373 = vld [vmem:[#allocation7 + $0x478] sm:$0xff]
    %v374 = vld [vmem:[#allocation7 + $0x480] sm:$0xff]
    %v375 = vld [vmem:[#allocation7 + $0x488] sm:$0xff]
    %v376 = vld [vmem:[#allocation7 + $0x490] sm:$0xff]
    %v377 = vld [vmem:[#allocation7 + $0x498] sm:$0xff]
    %v378 = vld [vmem:[#allocation7 + $0x4a0] sm:$0xff]
    %v379 = vld [vmem:[#allocation7 + $0x4a8] sm:$0xff]
    %v380 = vld [vmem:[#allocation7 + $0x4b0] sm:$0xff]
    %v381 = vld [vmem:[#allocation7 + $0x4b8] sm:$0xff]
    %v382 = vld [vmem:[#allocation7 + $0x4c0] sm:$0xff]
    %v383 = vld [vmem:[#allocation7 + $0x4c8] sm:$0xff]
    %v384 = vld [vmem:[#allocation7 + $0x4d0] sm:$0xff]
    %v385 = vld [vmem:[#allocation7 + $0x4d8] sm:$0xff]
    %v386 = vld [vmem:[#allocation7 + $0x4e0] sm:$0xff]
    %v387 = vld [vmem:[#allocation7 + $0x4e8] sm:$0xff]
    %v388 = vld [vmem:[#allocation7 + $0x4f0] sm:$0xff]
    %v389 = vld [vmem:[#allocation7 + $0x4f8] sm:$0xff]
    %v390 = vld [vmem:[#allocation7 + $0x500] sm:$0xff]
    %v391 = vld [vmem:[#allocation7 + $0x508] sm:$0xff]
    %v392 = vld [vmem:[#allocation7 + $0x510] sm:$0xff]
    %v393 = vld [vmem:[#allocation7 + $0x518] sm:$0xff]
    %v394 = vld [vmem:[#allocation7 + $0x520] sm:$0xff]
    %v395 = vld [vmem:[#allocation7 + $0x528] sm:$0xff]
    %v396 = vld [vmem:[#allocation7 + $0x530] sm:$0xff]
    %v397 = vld [vmem:[#allocation7 + $0x538] sm:$0xff]
    %v398 = vld [vmem:[#allocation7 + $0x540] sm:$0xff]
    %v399 = vld [vmem:[#allocation7 + $0x548] sm:$0xff]
    %v400 = vld [vmem:[#allocation7 + $0x550] sm:$0xff]
    %v401 = vld [vmem:[#allocation7 + $0x558] sm:$0xff]
    %v402 = vld [vmem:[#allocation7 + $0x560] sm:$0xff]
    %v403 = vld [vmem:[#allocation7 + $0x568] sm:$0xff]
    %v404 = vld [vmem:[#allocation7 + $0x570] sm:$0xff]
    %v405 = vld [vmem:[#allocation7 + $0x578] sm:$0xff]
    %v406 = vld [vmem:[#allocation7 + $0x580] sm:$0xff]
    %v407 = vld [vmem:[#allocation7 + $0x588] sm:$0xff]
    %v408 = vld [vmem:[#allocation7 + $0x590] sm:$0xff]
    %v409 = vld [vmem:[#allocation7 + $0x598] sm:$0xff]
    %v410 = vld [vmem:[#allocation7 + $0x5a0] sm:$0xff]
    %v411 = vld [vmem:[#allocation7 + $0x5a8] sm:$0xff]
    %v412 = vld [vmem:[#allocation7 + $0x5b0] sm:$0xff]
    %v413 = vld [vmem:[#allocation7 + $0x5b8] sm:$0xff]
    %v414 = vld [vmem:[#allocation7 + $0x5c0] sm:$0xff]
    %v415 = vld [vmem:[#allocation7 + $0x5c8] sm:$0xff]
    %v416 = vld [vmem:[#allocation7 + $0x5d0] sm:$0xff]
    %v417 = vld [vmem:[#allocation7 + $0x5d8] sm:$0xff]
    %v418 = vld [vmem:[#allocation7 + $0x5e0] sm:$0xff]
    %v419 = vld [vmem:[#allocation7 + $0x5e8] sm:$0xff]
    %v420 = vld [vmem:[#allocation7 + $0x5f0] sm:$0xff]
    %v421 = vld [vmem:[#allocation7 + $0x5f8] sm:$0xff]
    %v422 = vld [vmem:[#allocation7 + $0x600] sm:$0xff]
    %v423 = vld [vmem:[#allocation7 + $0x608] sm:$0xff]
    %v424 = vld [vmem:[#allocation7 + $0x610] sm:$0xff]
    %v425 = vld [vmem:[#allocation7 + $0x618] sm:$0xff]
    %v426 = vld [vmem:[#allocation7 + $0x620] sm:$0xff]
    %v427 = vld [vmem:[#allocation7 + $0x628] sm:$0xff]
    %v428 = vld [vmem:[#allocation7 + $0x630] sm:$0xff]
    %v429 = vld [vmem:[#allocation7 + $0x638] sm:$0xff]
    %v430 = vld [vmem:[#allocation7 + $0x640] sm:$0xff]
    %v431 = vld [vmem:[#allocation7 + $0x648] sm:$0xff]
    %v432 = vld [vmem:[#allocation7 + $0x650] sm:$0xff]
    %v433 = vld [vmem:[#allocation7 + $0x658] sm:$0xff]
    %v434 = vld [vmem:[#allocation7 + $0x660] sm:$0xff]
    %v435 = vld [vmem:[#allocation7 + $0x668] sm:$0xff]
    %v436 = vld [vmem:[#allocation7 + $0x670] sm:$0xff]
    %v437 = vld [vmem:[#allocation7 + $0x678] sm:$0xff]
    %v438 = vld [vmem:[#allocation7 + $0x680] sm:$0xff]
    %v439 = vld [vmem:[#allocation7 + $0x688] sm:$0xff]
    %v440 = vld [vmem:[#allocation7 + $0x690] sm:$0xff]
    %v441 = vld [vmem:[#allocation7 + $0x698] sm:$0xff]
    %v442 = vld [vmem:[#allocation7 + $0x6a0] sm:$0xff]
    %v443 = vld [vmem:[#allocation7 + $0x6a8] sm:$0xff]
    %v444 = vld [vmem:[#allocation7 + $0x6b0] sm:$0xff]
    %v445 = vld [vmem:[#allocation7 + $0x6b8] sm:$0xff]
    %v446 = vld [vmem:[#allocation7 + $0x6c0] sm:$0xff]
    %v447 = vld [vmem:[#allocation7 + $0x6c8] sm:$0xff]
    %v448 = vld [vmem:[#allocation7 + $0x6d0] sm:$0xff]
    %v449 = vld [vmem:[#allocation7 + $0x6d8] sm:$0xff]
    %v450 = vld [vmem:[#allocation7 + $0x6e0] sm:$0xff]
    %v451 = vld [vmem:[#allocation7 + $0x6e8] sm:$0xff]
    %v452 = vld [vmem:[#allocation7 + $0x6f0] sm:$0xff]
    %v453 = vld [vmem:[#allocation7 + $0x6f8] sm:$0xff]
    %v454 = vld [vmem:[#allocation7 + $0x700] sm:$0xff]
    %v455 = vld [vmem:[#allocation7 + $0x708] sm:$0xff]
    %v456 = vld [vmem:[#allocation7 + $0x710] sm:$0xff]
    %v457 = vld [vmem:[#allocation7 + $0x718] sm:$0xff]
    %v458 = vld [vmem:[#allocation7 + $0x720] sm:$0xff]
    %v459 = vld [vmem:[#allocation7 + $0x728] sm:$0xff]
    %v460 = vld [vmem:[#allocation7 + $0x730] sm:$0xff]
    %v461 = vld [vmem:[#allocation7 + $0x738] sm:$0xff]
    %v462 = vld [vmem:[#allocation7 + $0x740] sm:$0xff]
    %v463 = vld [vmem:[#allocation7 + $0x748] sm:$0xff]
    %v464 = vld [vmem:[#allocation7 + $0x750] sm:$0xff]
    %v465 = vld [vmem:[#allocation7 + $0x758] sm:$0xff]
    %v466 = vld [vmem:[#allocation7 + $0x760] sm:$0xff]
    %v467 = vld [vmem:[#allocation7 + $0x768] sm:$0xff]
    %v468 = vld [vmem:[#allocation7 + $0x770] sm:$0xff]
    %v469 = vld [vmem:[#allocation7 + $0x778] sm:$0xff]
    %v470 = vld [vmem:[#allocation7 + $0x780] sm:$0xff]
    %v471 = vld [vmem:[#allocation7 + $0x788] sm:$0xff]
    %v472 = vld [vmem:[#allocation7 + $0x790] sm:$0xff]
    %v473 = vld [vmem:[#allocation7 + $0x798] sm:$0xff]
    %v474 = vld [vmem:[#allocation7 + $0x7a0] sm:$0xff]
    %v475 = vld [vmem:[#allocation7 + $0x7a8] sm:$0xff]
    %v476 = vld [vmem:[#allocation7 + $0x7b0] sm:$0xff]
    %v477 = vld [vmem:[#allocation7 + $0x7b8] sm:$0xff]
    %v478 = vld [vmem:[#allocation7 + $0x7c0] sm:$0xff]
    %v479 = vld [vmem:[#allocation7 + $0x7c8] sm:$0xff]
    %v480 = vld [vmem:[#allocation7 + $0x7d0] sm:$0xff]
    %v481 = vld [vmem:[#allocation7 + $0x7d8] sm:$0xff]
    %v482 = vld [vmem:[#allocation7 + $0x7e0] sm:$0xff]
    %v483 = vld [vmem:[#allocation7 + $0x7e8] sm:$0xff]
    %v484 = vld [vmem:[#allocation7 + $0x7f0] sm:$0xff]
    %v485 = vld [vmem:[#allocation7 + $0x7f8] sm:$0xff]
    %486 = vmatprep.subr.mxu0 %v291
    %487 = vmatpush1.msra.mxu0 %v290
    %488 = vmatprep.subr.mxu0 %v287
    %489 = vmatpush1.msra.mxu0 %v286
    %490 = vmatprep.subr.mxu0 %v283
    %491 = vmatpush1.msra.mxu0 %v282
    %492 = vmatprep.subr.mxu0 %v279
    %493 = vmatpush1.msra.mxu0 %v278
    %494 = vmatprep.subr.mxu0 %v275
    %495 = vmatpush1.msra.mxu0 %v274
    %496 = vmatprep.subr.mxu0 %v271
    %497 = vmatpush1.msra.mxu0 %v270
    %498 = vmatprep.subr.mxu0 %v267
    %499 = vmatpush1.msra.mxu0 %v266
    %500 = vmatprep.subr.mxu0 %v263
    %501 = vmatpush1.msra.mxu0 %v262
    %502 = vmatprep.subr.mxu0 %v259
    %503 = vmatpush1.msra.mxu0 %v258
    %504 = vmatprep.subr.mxu0 %v255
    %505 = vmatpush1.msra.mxu0 %v254
    %506 = vmatprep.subr.mxu0 %v251
    %507 = vmatpush1.msra.mxu0 %v250
    %508 = vmatprep.subr.mxu0 %v247
    %509 = vmatpush1.msra.mxu0 %v246
    %510 = vmatprep.subr.mxu0 %v243
    %511 = vmatpush1.msra.mxu0 %v242
    %512 = vmatprep.subr.mxu0 %v239
    %513 = vmatpush1.msra.mxu0 %v238
    %514 = vmatprep.subr.mxu0 %v235
    %515 = vmatpush1.msra.mxu0 %v234
    %516 = vmatprep.subr.mxu0 %v231
    %517 = vmatpush1.msra.mxu0 %v230
    %518 = vmatprep.subr.mxu0 %v355
    %519 = vmatpush2.msra.mxu0 %v354
    %520 = vmatprep.subr.mxu0 %v351
    %521 = vmatpush2.msra.mxu0 %v350
    %522 = vmatprep.subr.mxu0 %v347
    %523 = vmatpush2.msra.mxu0 %v346
    %524 = vmatprep.subr.mxu0 %v343
    %525 = vmatpush2.msra.mxu0 %v342
    %526 = vmatprep.subr.mxu0 %v339
    %527 = vmatpush2.msra.mxu0 %v338
    %528 = vmatprep.subr.mxu0 %v335
    %529 = vmatpush2.msra.mxu0 %v334
    %530 = vmatprep.subr.mxu0 %v331
    %531 = vmatpush2.msra.mxu0 %v330
    %532 = vmatprep.subr.mxu0 %v327
    %533 = vmatpush2.msra.mxu0 %v326
    %534 = vmatprep.subr.mxu0 %v323
    %535 = vmatpush2.msra.mxu0 %v322
    %536 = vmatprep.subr.mxu0 %v319
    %537 = vmatpush2.msra.mxu0 %v318
    %538 = vmatprep.subr.mxu0 %v315
    %539 = vmatpush2.msra.mxu0 %v314
    %540 = vmatprep.subr.mxu0 %v311
    %541 = vmatpush2.msra.mxu0 %v310
    %542 = vmatprep.subr.mxu0 %v307
    %543 = vmatpush2.msra.mxu0 %v306
    %544 = vmatprep.subr.mxu0 %v303
    %545 = vmatpush2.msra.mxu0 %v302
    %546 = vmatprep.subr.mxu0 %v299
    %547 = vmatpush2.msra.mxu0 %v298
    %548 = vmatprep.subr.mxu0 %v295
    %549 = vmatpush2.msra.mxu0 %v294
    %550 = vmatprep.mubr.f32.mxu0 %v185
    %551 = vmatmul.mubr.f32.gmra.mxu0 %v183
    %v552 = vpop.f32.mrf.mxu0
    %v553 = vadd.f32 0.0, %v552
    %v554 = vpop.f32.mrf.mxu0
    %v555 = vadd.f32 0.0, %v554
    %556 = vdwg.mxu0
    %557 = vmatprep.subr.mxu0 %v419
    %558 = vmatpush1.msra.mxu0 %v418
    %559 = vmatprep.subr.mxu0 %v415
    %560 = vmatpush1.msra.mxu0 %v414
    %561 = vmatprep.subr.mxu0 %v411
    %562 = vmatpush1.msra.mxu0 %v410
    %563 = vmatprep.subr.mxu0 %v407
    %564 = vmatpush1.msra.mxu0 %v406
    %565 = vmatprep.subr.mxu0 %v403
    %566 = vmatpush1.msra.mxu0 %v402
    %567 = vmatprep.subr.mxu0 %v399
    %568 = vmatpush1.msra.mxu0 %v398
    %569 = vmatprep.subr.mxu0 %v395
    %570 = vmatpush1.msra.mxu0 %v394
    %571 = vmatprep.subr.mxu0 %v391
    %572 = vmatpush1.msra.mxu0 %v390
    %573 = vmatprep.subr.mxu0 %v387
    %574 = vmatpush1.msra.mxu0 %v386
    %575 = vmatprep.subr.mxu0 %v383
    %576 = vmatpush1.msra.mxu0 %v382
    %577 = vmatprep.subr.mxu0 %v379
    %578 = vmatpush1.msra.mxu0 %v378
    %579 = vmatprep.subr.mxu0 %v375
    %580 = vmatpush1.msra.mxu0 %v374
    %581 = vmatprep.subr.mxu0 %v371
    %582 = vmatpush1.msra.mxu0 %v370
    %583 = vmatprep.subr.mxu0 %v367
    %584 = vmatpush1.msra.mxu0 %v366
    %585 = vmatprep.subr.mxu0 %v363
    %586 = vmatpush1.msra.mxu0 %v362
    %587 = vmatprep.subr.mxu0 %v359
    %588 = vmatpush1.msra.mxu0 %v358
    %589 = vmatprep.subr.mxu0 %v483
    %590 = vmatpush2.msra.mxu0 %v482
    %591 = vmatprep.subr.mxu0 %v479
    %592 = vmatpush2.msra.mxu0 %v478
    %593 = vmatprep.subr.mxu0 %v475
    %594 = vmatpush2.msra.mxu0 %v474
    %595 = vmatprep.subr.mxu0 %v471
    %596 = vmatpush2.msra.mxu0 %v470
    %597 = vmatprep.subr.mxu0 %v467
    %598 = vmatpush2.msra.mxu0 %v466
    %599 = vmatprep.subr.mxu0 %v463
    %600 = vmatpush2.msra.mxu0 %v462
    %601 = vmatprep.subr.mxu0 %v459
    %602 = vmatpush2.msra.mxu0 %v458
    %603 = vmatprep.subr.mxu0 %v455
    %604 = vmatpush2.msra.mxu0 %v454
    %605 = vmatprep.subr.mxu0 %v451
    %606 = vmatpush2.msra.mxu0 %v450
    %607 = vmatprep.subr.mxu0 %v447
    %608 = vmatpush2.msra.mxu0 %v446
    %609 = vmatprep.subr.mxu0 %v443
    %610 = vmatpush2.msra.mxu0 %v442
    %611 = vmatprep.subr.mxu0 %v439
    %612 = vmatpush2.msra.mxu0 %v438
    %613 = vmatprep.subr.mxu0 %v435
    %614 = vmatpush2.msra.mxu0 %v434
    %615 = vmatprep.subr.mxu0 %v431
    %616 = vmatpush2.msra.mxu0 %v430
    %617 = vmatprep.subr.mxu0 %v427
    %618 = vmatpush2.msra.mxu0 %v426
    %619 = vmatprep.subr.mxu0 %v423
    %620 = vmatpush2.msra.mxu0 %v422
    %621 = vmatprep.mubr.f32.mxu0 %v226
    %622 = vmatmul.mubr.f32.gmra.mxu0 %v224
    %v623 = vpop.f32.mrf.mxu0
    %v624 = vadd.f32 %v553, %v623
    %v625 = vpop.f32.mrf.mxu0
    %v626 = vadd.f32 %v555, %v625
    %627 = vdwg.mxu0
    %628 = vmatprep.subr.mxu0 %v293
    %629 = vmatpush1.msra.mxu0 %v292
    %630 = vmatprep.subr.mxu0 %v289
    %631 = vmatpush1.msra.mxu0 %v288
    %632 = vmatprep.subr.mxu0 %v285
    %633 = vmatpush1.msra.mxu0 %v284
    %634 = vmatprep.subr.mxu0 %v281
    %635 = vmatpush1.msra.mxu0 %v280
    %636 = vmatprep.subr.mxu0 %v277
    %637 = vmatpush1.msra.mxu0 %v276
    %638 = vmatprep.subr.mxu0 %v273
    %639 = vmatpush1.msra.mxu0 %v272
    %640 = vmatprep.subr.mxu0 %v269
    %641 = vmatpush1.msra.mxu0 %v268
    %642 = vmatprep.subr.mxu0 %v265
    %643 = vmatpush1.msra.mxu0 %v264
    %644 = vmatprep.subr.mxu0 %v261
    %645 = vmatpush1.msra.mxu0 %v260
    %646 = vmatprep.subr.mxu0 %v257
    %647 = vmatpush1.msra.mxu0 %v256
    %648 = vmatprep.subr.mxu0 %v253
    %649 = vmatpush1.msra.mxu0 %v252
    %650 = vmatprep.subr.mxu0 %v249
    %651 = vmatpush1.msra.mxu0 %v248
    %652 = vmatprep.subr.mxu0 %v245
    %653 = vmatpush1.msra.mxu0 %v244
    %654 = vmatprep.subr.mxu0 %v241
    %655 = vmatpush1.msra.mxu0 %v240
    %656 = vmatprep.subr.mxu0 %v237
    %657 = vmatpush1.msra.mxu0 %v236
    %658 = vmatprep.subr.mxu0 %v233
    %659 = vmatpush1.msra.mxu0 %v232
    %660 = vmatprep.subr.mxu0 %v357
    %661 = vmatpush2.msra.mxu0 %v356
    %662 = vmatprep.subr.mxu0 %v353
    %663 = vmatpush2.msra.mxu0 %v352
    %664 = vmatprep.subr.mxu0 %v349
    %665 = vmatpush2.msra.mxu0 %v348
    %666 = vmatprep.subr.mxu0 %v345
    %667 = vmatpush2.msra.mxu0 %v344
    %668 = vmatprep.subr.mxu0 %v341
    %669 = vmatpush2.msra.mxu0 %v340
    %670 = vmatprep.subr.mxu0 %v337
    %671 = vmatpush2.msra.mxu0 %v336
    %672 = vmatprep.subr.mxu0 %v333
    %673 = vmatpush2.msra.mxu0 %v332
    %674 = vmatprep.subr.mxu0 %v329
    %675 = vmatpush2.msra.mxu0 %v328
    %676 = vmatprep.subr.mxu0 %v325
    %677 = vmatpush2.msra.mxu0 %v324
    %678 = vmatprep.subr.mxu0 %v321
    %679 = vmatpush2.msra.mxu0 %v320
    %680 = vmatprep.subr.mxu0 %v317
    %681 = vmatpush2.msra.mxu0 %v316
    %682 = vmatprep.subr.mxu0 %v313
    %683 = vmatpush2.msra.mxu0 %v312
    %684 = vmatprep.subr.mxu0 %v309
    %685 = vmatpush2.msra.mxu0 %v308
    %686 = vmatprep.subr.mxu0 %v305
    %687 = vmatpush2.msra.mxu0 %v304
    %688 = vmatprep.subr.mxu0 %v301
    %689 = vmatpush2.msra.mxu0 %v300
    %690 = vmatprep.subr.mxu0 %v297
    %691 = vmatpush2.msra.mxu0 %v296
    %692 = vmatprep.mubr.f32.mxu0 %v185
    %693 = vmatmul.mubr.f32.gmra.mxu0 %v183
    %v694 = vpop.f32.mrf.mxu0
    %v695 = vadd.f32 0.0, %v694
    %v696 = vpop.f32.mrf.mxu0
    %v697 = vadd.f32 0.0, %v696
    %698 = vdwg.mxu0
    %699 = vmatprep.subr.mxu0 %v421
    %700 = vmatpush1.msra.mxu0 %v420
    %701 = vmatprep.subr.mxu0 %v417
    %702 = vmatpush1.msra.mxu0 %v416
    %703 = vmatprep.subr.mxu0 %v413
    %704 = vmatpush1.msra.mxu0 %v412
    %705 = vmatprep.subr.mxu0 %v409
    %706 = vmatpush1.msra.mxu0 %v408
    %707 = vmatprep.subr.mxu0 %v405
    %708 = vmatpush1.msra.mxu0 %v404
    %709 = vmatprep.subr.mxu0 %v401
    %710 = vmatpush1.msra.mxu0 %v400
    %711 = vmatprep.subr.mxu0 %v397
    %712 = vmatpush1.msra.mxu0 %v396
    %713 = vmatprep.subr.mxu0 %v393
    %714 = vmatpush1.msra.mxu0 %v392
    %715 = vmatprep.subr.mxu0 %v389
    %716 = vmatpush1.msra.mxu0 %v388
    %717 = vmatprep.subr.mxu0 %v385
    %718 = vmatpush1.msra.mxu0 %v384
    %719 = vmatprep.subr.mxu0 %v381
    %720 = vmatpush1.msra.mxu0 %v380
    %721 = vmatprep.subr.mxu0 %v377
    %722 = vmatpush1.msra.mxu0 %v376
    %723 = vmatprep.subr.mxu0 %v373
    %724 = vmatpush1.msra.mxu0 %v372
    %725 = vmatprep.subr.mxu0 %v369
    %726 = vmatpush1.msra.mxu0 %v368
    %727 = vmatprep.subr.mxu0 %v365
    %728 = vmatpush1.msra.mxu0 %v364
    %729 = vmatprep.subr.mxu0 %v361
    %730 = vmatpush1.msra.mxu0 %v360
    %731 = vmatprep.subr.mxu0 %v485
    %732 = vmatpush2.msra.mxu0 %v484
    %733 = vmatprep.subr.mxu0 %v481
    %734 = vmatpush2.msra.mxu0 %v480
    %735 = vmatprep.subr.mxu0 %v477
    %736 = vmatpush2.msra.mxu0 %v476
    %737 = vmatprep.subr.mxu0 %v473
    %738 = vmatpush2.msra.mxu0 %v472
    %739 = vmatprep.subr.mxu0 %v469
    %740 = vmatpush2.msra.mxu0 %v468
    %741 = vmatprep.subr.mxu0 %v465
    %742 = vmatpush2.msra.mxu0 %v464
    %743 = vmatprep.subr.mxu0 %v461
    %744 = vmatpush2.msra.mxu0 %v460
    %745 = vmatprep.subr.mxu0 %v457
    %746 = vmatpush2.msra.mxu0 %v456
    %747 = vmatprep.subr.mxu0 %v453
    %748 = vmatpush2.msra.mxu0 %v452
    %749 = vmatprep.subr.mxu0 %v449
    %750 = vmatpush2.msra.mxu0 %v448
    %751 = vmatprep.subr.mxu0 %v445
    %752 = vmatpush2.msra.mxu0 %v444
    %753 = vmatprep.subr.mxu0 %v441
    %754 = vmatpush2.msra.mxu0 %v440
    %755 = vmatprep.subr.mxu0 %v437
    %756 = vmatpush2.msra.mxu0 %v436
    %757 = vmatprep.subr.mxu0 %v433
    %758 = vmatpush2.msra.mxu0 %v432
    %759 = vmatprep.subr.mxu0 %v429
    %760 = vmatpush2.msra.mxu0 %v428
    %761 = vmatprep.subr.mxu0 %v425
    %762 = vmatpush2.msra.mxu0 %v424
    %763 = vmatprep.mubr.f32.mxu0 %v226
    %764 = vmatmul.mubr.f32.gmra.mxu0 %v224
    %v765 = vpop.f32.mrf.mxu0
    %v766 = vadd.f32 %v695, %v765
    %v767 = vpop.f32.mrf.mxu0
    %v768 = vadd.f32 %v697, %v767
    %769 = vdwg.mxu0
    %v770 = vsub.f32 %v183, %v624
    %v771 = vsub.f32 %v185, %v626
    %v772 = vsub.f32 %v224, %v766
    %v773 = vsub.f32 %v226, %v768
    %v774 = vmul.f32 %v770, %v770
    %v775 = vmul.f32 %v771, %v771
    %v776 = vmul.f32 %v772, %v772
    %v777 = vmul.f32 %v773, %v773
    %s778 = scalar_lea.vmem [#allocation8], 1
    %v779 = vld [vmem:[%s778] ss:$8 sm:$0xf]
    %s780 = scalar_lea.vmem [#allocation8], 2
    %v781 = vld [vmem:[%s780] ss:$8 sm:$0xf]
    %782 = vmatprep.subr.mxu0 %v291
    %783 = vmatpush1.msra.mxu0 %v290
    %784 = vmatprep.subr.mxu0 %v287
    %785 = vmatpush1.msra.mxu0 %v286
    %786 = vmatprep.subr.mxu0 %v283
    %787 = vmatpush1.msra.mxu0 %v282
    %788 = vmatprep.subr.mxu0 %v279
    %789 = vmatpush1.msra.mxu0 %v278
    %790 = vmatprep.subr.mxu0 %v275
    %791 = vmatpush1.msra.mxu0 %v274
    %792 = vmatprep.subr.mxu0 %v271
    %793 = vmatpush1.msra.mxu0 %v270
    %794 = vmatprep.subr.mxu0 %v267
    %795 = vmatpush1.msra.mxu0 %v266
    %796 = vmatprep.subr.mxu0 %v263
    %797 = vmatpush1.msra.mxu0 %v262
    %798 = vmatprep.subr.mxu0 %v259
    %799 = vmatpush1.msra.mxu0 %v258
    %800 = vmatprep.subr.mxu0 %v255
    %801 = vmatpush1.msra.mxu0 %v254
    %802 = vmatprep.subr.mxu0 %v251
    %803 = vmatpush1.msra.mxu0 %v250
    %804 = vmatprep.subr.mxu0 %v247
    %805 = vmatpush1.msra.mxu0 %v246
    %806 = vmatprep.subr.mxu0 %v243
    %807 = vmatpush1.msra.mxu0 %v242
    %808 = vmatprep.subr.mxu0 %v239
    %809 = vmatpush1.msra.mxu0 %v238
    %810 = vmatprep.subr.mxu0 %v235
    %811 = vmatpush1.msra.mxu0 %v234
    %812 = vmatprep.subr.mxu0 %v231
    %813 = vmatpush1.msra.mxu0 %v230
    %814 = vmatprep.subr.mxu0 %v355
    %815 = vmatpush2.msra.mxu0 %v354
    %816 = vmatprep.subr.mxu0 %v351
    %817 = vmatpush2.msra.mxu0 %v350
    %818 = vmatprep.subr.mxu0 %v347
    %819 = vmatpush2.msra.mxu0 %v346
    %820 = vmatprep.subr.mxu0 %v343
    %821 = vmatpush2.msra.mxu0 %v342
    %822 = vmatprep.subr.mxu0 %v339
    %823 = vmatpush2.msra.mxu0 %v338
    %824 = vmatprep.subr.mxu0 %v335
    %825 = vmatpush2.msra.mxu0 %v334
    %826 = vmatprep.subr.mxu0 %v331
    %827 = vmatpush2.msra.mxu0 %v330
    %828 = vmatprep.subr.mxu0 %v327
    %829 = vmatpush2.msra.mxu0 %v326
    %830 = vmatprep.subr.mxu0 %v323
    %831 = vmatpush2.msra.mxu0 %v322
    %832 = vmatprep.subr.mxu0 %v319
    %833 = vmatpush2.msra.mxu0 %v318
    %834 = vmatprep.subr.mxu0 %v315
    %835 = vmatpush2.msra.mxu0 %v314
    %836 = vmatprep.subr.mxu0 %v311
    %837 = vmatpush2.msra.mxu0 %v310
    %838 = vmatprep.subr.mxu0 %v307
    %839 = vmatpush2.msra.mxu0 %v306
    %840 = vmatprep.subr.mxu0 %v303
    %841 = vmatpush2.msra.mxu0 %v302
    %842 = vmatprep.subr.mxu0 %v299
    %843 = vmatpush2.msra.mxu0 %v298
    %844 = vmatprep.subr.mxu0 %v295
    %845 = vmatpush2.msra.mxu0 %v294
    %846 = vmatprep.mubr.f32.mxu0 %v775
    %847 = vmatmul.mubr.f32.gmra.mxu0 %v774
    %v848 = vpop.f32.mrf.mxu0
    %v849 = vadd.f32 0.001, %v848
    %v850 = vpop.f32.mrf.mxu0
    %v851 = vadd.f32 0.001, %v850
    %852 = vdwg.mxu0
    %853 = vmatprep.subr.mxu0 %v419
    %854 = vmatpush1.msra.mxu0 %v418
    %855 = vmatprep.subr.mxu0 %v415
    %856 = vmatpush1.msra.mxu0 %v414
    %857 = vmatprep.subr.mxu0 %v411
    %858 = vmatpush1.msra.mxu0 %v410
    %859 = vmatprep.subr.mxu0 %v407
    %860 = vmatpush1.msra.mxu0 %v406
    %861 = vmatprep.subr.mxu0 %v403
    %862 = vmatpush1.msra.mxu0 %v402
    %863 = vmatprep.subr.mxu0 %v399
    %864 = vmatpush1.msra.mxu0 %v398
    %865 = vmatprep.subr.mxu0 %v395
    %866 = vmatpush1.msra.mxu0 %v394
    %867 = vmatprep.subr.mxu0 %v391
    %868 = vmatpush1.msra.mxu0 %v390
    %869 = vmatprep.subr.mxu0 %v387
    %870 = vmatpush1.msra.mxu0 %v386
    %871 = vmatprep.subr.mxu0 %v383
    %872 = vmatpush1.msra.mxu0 %v382
    %873 = vmatprep.subr.mxu0 %v379
    %874 = vmatpush1.msra.mxu0 %v378
    %875 = vmatprep.subr.mxu0 %v375
    %876 = vmatpush1.msra.mxu0 %v374
    %877 = vmatprep.subr.mxu0 %v371
    %878 = vmatpush1.msra.mxu0 %v370
    %879 = vmatprep.subr.mxu0 %v367
    %880 = vmatpush1.msra.mxu0 %v366
    %881 = vmatprep.subr.mxu0 %v363
    %882 = vmatpush1.msra.mxu0 %v362
    %883 = vmatprep.subr.mxu0 %v359
    %884 = vmatpush1.msra.mxu0 %v358
    %885 = vmatprep.subr.mxu0 %v483
    %886 = vmatpush2.msra.mxu0 %v482
    %887 = vmatprep.subr.mxu0 %v479
    %888 = vmatpush2.msra.mxu0 %v478
    %889 = vmatprep.subr.mxu0 %v475
    %890 = vmatpush2.msra.mxu0 %v474
    %891 = vmatprep.subr.mxu0 %v471
    %892 = vmatpush2.msra.mxu0 %v470
    %893 = vmatprep.subr.mxu0 %v467
    %894 = vmatpush2.msra.mxu0 %v466
    %895 = vmatprep.subr.mxu0 %v463
    %896 = vmatpush2.msra.mxu0 %v462
    %897 = vmatprep.subr.mxu0 %v459
    %898 = vmatpush2.msra.mxu0 %v458
    %899 = vmatprep.subr.mxu0 %v455
    %900 = vmatpush2.msra.mxu0 %v454
    %901 = vmatprep.subr.mxu0 %v451
    %902 = vmatpush2.msra.mxu0 %v450
    %903 = vmatprep.subr.mxu0 %v447
    %904 = vmatpush2.msra.mxu0 %v446
    %905 = vmatprep.subr.mxu0 %v443
    %906 = vmatpush2.msra.mxu0 %v442
    %907 = vmatprep.subr.mxu0 %v439
    %908 = vmatpush2.msra.mxu0 %v438
    %909 = vmatprep.subr.mxu0 %v435
    %910 = vmatpush2.msra.mxu0 %v434
    %911 = vmatprep.subr.mxu0 %v431
    %912 = vmatpush2.msra.mxu0 %v430
    %913 = vmatprep.subr.mxu0 %v427
    %914 = vmatpush2.msra.mxu0 %v426
    %915 = vmatprep.subr.mxu0 %v423
    %916 = vmatpush2.msra.mxu0 %v422
    %917 = vmatprep.mubr.f32.mxu0 %v777
    %918 = vmatmul.mubr.f32.gmra.mxu0 %v776
    %v919 = vpop.f32.mrf.mxu0
    %v920 = vadd.f32 %v849, %v919
    %v921 = vpop.f32.mrf.mxu0
    %v922 = vadd.f32 %v851, %v921
    %923 = vdwg.mxu0
    %924 = vmatprep.subr.mxu0 %v293
    %925 = vmatpush1.msra.mxu0 %v292
    %926 = vmatprep.subr.mxu0 %v289
    %927 = vmatpush1.msra.mxu0 %v288
    %928 = vmatprep.subr.mxu0 %v285
    %929 = vmatpush1.msra.mxu0 %v284
    %930 = vmatprep.subr.mxu0 %v281
    %931 = vmatpush1.msra.mxu0 %v280
    %932 = vmatprep.subr.mxu0 %v277
    %933 = vmatpush1.msra.mxu0 %v276
    %934 = vmatprep.subr.mxu0 %v273
    %935 = vmatpush1.msra.mxu0 %v272
    %936 = vmatprep.subr.mxu0 %v269
    %937 = vmatpush1.msra.mxu0 %v268
    %938 = vmatprep.subr.mxu0 %v265
    %939 = vmatpush1.msra.mxu0 %v264
    %940 = vmatprep.subr.mxu0 %v261
    %941 = vmatpush1.msra.mxu0 %v260
    %942 = vmatprep.subr.mxu0 %v257
    %943 = vmatpush1.msra.mxu0 %v256
    %944 = vmatprep.subr.mxu0 %v253
    %945 = vmatpush1.msra.mxu0 %v252
    %946 = vmatprep.subr.mxu0 %v249
    %947 = vmatpush1.msra.mxu0 %v248
    %948 = vmatprep.subr.mxu0 %v245
    %949 = vmatpush1.msra.mxu0 %v244
    %950 = vmatprep.subr.mxu0 %v241
    %951 = vmatpush1.msra.mxu0 %v240
    %952 = vmatprep.subr.mxu0 %v237
    %953 = vmatpush1.msra.mxu0 %v236
    %954 = vmatprep.subr.mxu0 %v233
    %955 = vmatpush1.msra.mxu0 %v232
    %956 = vmatprep.subr.mxu0 %v357
    %957 = vmatpush2.msra.mxu0 %v356
    %958 = vmatprep.subr.mxu0 %v353
    %959 = vmatpush2.msra.mxu0 %v352
    %960 = vmatprep.subr.mxu0 %v349
    %961 = vmatpush2.msra.mxu0 %v348
    %962 = vmatprep.subr.mxu0 %v345
    %963 = vmatpush2.msra.mxu0 %v344
    %964 = vmatprep.subr.mxu0 %v341
    %965 = vmatpush2.msra.mxu0 %v340
    %966 = vmatprep.subr.mxu0 %v337
    %967 = vmatpush2.msra.mxu0 %v336
    %968 = vmatprep.subr.mxu0 %v333
    %969 = vmatpush2.msra.mxu0 %v332
    %970 = vmatprep.subr.mxu0 %v329
    %971 = vmatpush2.msra.mxu0 %v328
    %972 = vmatprep.subr.mxu0 %v325
    %973 = vmatpush2.msra.mxu0 %v324
    %974 = vmatprep.subr.mxu0 %v321
    %975 = vmatpush2.msra.mxu0 %v320
    %976 = vmatprep.subr.mxu0 %v317
    %977 = vmatpush2.msra.mxu0 %v316
    %978 = vmatprep.subr.mxu0 %v313
    %979 = vmatpush2.msra.mxu0 %v312
    %980 = vmatprep.subr.mxu0 %v309
    %981 = vmatpush2.msra.mxu0 %v308
    %982 = vmatprep.subr.mxu0 %v305
    %983 = vmatpush2.msra.mxu0 %v304
    %984 = vmatprep.subr.mxu0 %v301
    %985 = vmatpush2.msra.mxu0 %v300
    %986 = vmatprep.subr.mxu0 %v297
    %987 = vmatpush2.msra.mxu0 %v296
    %988 = vmatprep.mubr.f32.mxu0 %v775
    %989 = vmatmul.mubr.f32.gmra.mxu0 %v774
    %v990 = vpop.f32.mrf.mxu0
    %v991 = vadd.f32 0.001, %v990
    %v992 = vpop.f32.mrf.mxu0
    %v993 = vadd.f32 0.001, %v992
    %994 = vdwg.mxu0
    %995 = vmatprep.subr.mxu0 %v421
    %996 = vmatpush1.msra.mxu0 %v420
    %997 = vmatprep.subr.mxu0 %v417
    %998 = vmatpush1.msra.mxu0 %v416
    %999 = vmatprep.subr.mxu0 %v413
    %1000 = vmatpush1.msra.mxu0 %v412
    %1001 = vmatprep.subr.mxu0 %v409
    %1002 = vmatpush1.msra.mxu0 %v408
    %1003 = vmatprep.subr.mxu0 %v405
    %1004 = vmatpush1.msra.mxu0 %v404
    %1005 = vmatprep.subr.mxu0 %v401
    %1006 = vmatpush1.msra.mxu0 %v400
    %1007 = vmatprep.subr.mxu0 %v397
    %1008 = vmatpush1.msra.mxu0 %v396
    %1009 = vmatprep.subr.mxu0 %v393
    %1010 = vmatpush1.msra.mxu0 %v392
    %1011 = vmatprep.subr.mxu0 %v389
    %1012 = vmatpush1.msra.mxu0 %v388
    %1013 = vmatprep.subr.mxu0 %v385
    %1014 = vmatpush1.msra.mxu0 %v384
    %1015 = vmatprep.subr.mxu0 %v381
    %1016 = vmatpush1.msra.mxu0 %v380
    %1017 = vmatprep.subr.mxu0 %v377
    %1018 = vmatpush1.msra.mxu0 %v376
    %1019 = vmatprep.subr.mxu0 %v373
    %1020 = vmatpush1.msra.mxu0 %v372
    %1021 = vmatprep.subr.mxu0 %v369
    %1022 = vmatpush1.msra.mxu0 %v368
    %1023 = vmatprep.subr.mxu0 %v365
    %1024 = vmatpush1.msra.mxu0 %v364
    %1025 = vmatprep.subr.mxu0 %v361
    %1026 = vmatpush1.msra.mxu0 %v360
    %1027 = vmatprep.subr.mxu0 %v485
    %1028 = vmatpush2.msra.mxu0 %v484
    %1029 = vmatprep.subr.mxu0 %v481
    %1030 = vmatpush2.msra.mxu0 %v480
    %1031 = vmatprep.subr.mxu0 %v477
    %1032 = vmatpush2.msra.mxu0 %v476
    %1033 = vmatprep.subr.mxu0 %v473
    %1034 = vmatpush2.msra.mxu0 %v472
    %1035 = vmatprep.subr.mxu0 %v469
    %1036 = vmatpush2.msra.mxu0 %v468
    %1037 = vmatprep.subr.mxu0 %v465
    %1038 = vmatpush2.msra.mxu0 %v464
    %1039 = vmatprep.subr.mxu0 %v461
    %1040 = vmatpush2.msra.mxu0 %v460
    %1041 = vmatprep.subr.mxu0 %v457
    %1042 = vmatpush2.msra.mxu0 %v456
    %1043 = vmatprep.subr.mxu0 %v453
    %1044 = vmatpush2.msra.mxu0 %v452
    %1045 = vmatprep.subr.mxu0 %v449
    %1046 = vmatpush2.msra.mxu0 %v448
    %1047 = vmatprep.subr.mxu0 %v445
    %1048 = vmatpush2.msra.mxu0 %v444
    %1049 = vmatprep.subr.mxu0 %v441
    %1050 = vmatpush2.msra.mxu0 %v440
    %1051 = vmatprep.subr.mxu0 %v437
    %1052 = vmatpush2.msra.mxu0 %v436
    %1053 = vmatprep.subr.mxu0 %v433
    %1054 = vmatpush2.msra.mxu0 %v432
    %1055 = vmatprep.subr.mxu0 %v429
    %1056 = vmatpush2.msra.mxu0 %v428
    %1057 = vmatprep.subr.mxu0 %v425
    %1058 = vmatpush2.msra.mxu0 %v424
    %1059 = vmatprep.mubr.f32.mxu0 %v777
    %1060 = vmatmul.mubr.f32.gmra.mxu0 %v776
    %v1061 = vpop.f32.mrf.mxu0
    %v1062 = vadd.f32 %v991, %v1061
    %v1063 = vpop.f32.mrf.mxu0
    %v1064 = vadd.f32 %v993, %v1063
    %1065 = vdwg.mxu0
    %v1066 = vrsqrt.pop %v920
    %v1067 = vrsqrt.pop %v922
    %v1068 = vrsqrt.pop %v1062
    %v1069 = vrsqrt.pop %v1064
    %v1070 = vmul.f32 %v770, %v1066
    %v1071 = vmul.f32 %v771, %v1067
    %v1072 = vmul.f32 %v772, %v1068
    %v1073 = vmul.f32 %v773, %v1069
    %v1075 = vlaneseq
    %v1076 = vshrl.u32 %v1075, 7
    %v1077 = vsub.s32 0, %v1076
    %v1078 = vrot.slane %v779, %v1077
    %v1079 = vlaneseq
    %v1080 = vshrl.u32 %v1079, 7
    %v1081 = vsub.s32 1, %v1080
    %v1082 = vrot.slane %v779, %v1081
    %v1083 = vlaneseq
    %v1084 = vshrl.u32 %v1083, 7
    %v1085 = vsub.s32 2, %v1084
    %v1086 = vrot.slane %v779, %v1085
    %v1087 = vlaneseq
    %v1088 = vshrl.u32 %v1087, 7
    %v1089 = vsub.s32 3, %v1088
    %v1090 = vrot.slane %v779, %v1089
    %v1095 = vmul.f32 %v1070, %v1078
    %v1096 = vmul.f32 %v1071, %v1082
    %v1097 = vmul.f32 %v1072, %v1086
    %v1098 = vmul.f32 %v1073, %v1090
    %v1100 = vlaneseq
    %v1101 = vshrl.u32 %v1100, 7
    %v1102 = vsub.s32 0, %v1101
    %v1103 = vrot.slane %v781, %v1102
    %v1104 = vlaneseq
    %v1105 = vshrl.u32 %v1104, 7
    %v1106 = vsub.s32 1, %v1105
    %v1107 = vrot.slane %v781, %v1106
    %v1108 = vlaneseq
    %v1109 = vshrl.u32 %v1108, 7
    %v1110 = vsub.s32 2, %v1109
    %v1111 = vrot.slane %v781, %v1110
    %v1112 = vlaneseq
    %v1113 = vshrl.u32 %v1112, 7
    %v1114 = vsub.s32 3, %v1113
    %v1115 = vrot.slane %v781, %v1114
    %v1120 = vadd.f32 %v1095, %v1103
    %v1121 = vadd.f32 %v1096, %v1107
    %v1122 = vadd.f32 %v1097, %v1111
    %v1123 = vadd.f32 %v1098, %v1115
    %v1124 = vxor.u32 %v1120, 2147483648
    %v1125 = vxor.u32 %v1121, 2147483648
    %v1126 = vxor.u32 %v1122, 2147483648
    %v1127 = vxor.u32 %v1123, 2147483648
    %v1128 = vmul.f32 %v1124, 1.442695
    %v1129 = vpow.pop %v1128
    %v1130 = vmul.f32 %v1125, 1.442695
    %v1131 = vpow.pop %v1130
    %v1132 = vmul.f32 %v1126, 1.442695
    %v1133 = vpow.pop %v1132
    %v1134 = vmul.f32 %v1127, 1.442695
    %v1135 = vpow.pop %v1134
    %v1136 = vadd.f32 %v1129, 1.0
    %v1137 = vadd.f32 %v1131, 1.0
    %v1138 = vadd.f32 %v1133, 1.0
    %v1139 = vadd.f32 %v1135, 1.0
    %v1140 = vrcp.pop %v1136
    %v1141 = vmul.f32 1.0, %v1140
    %v1142 = vrcp.pop %v1137
    %v1143 = vmul.f32 1.0, %v1142
    %v1144 = vrcp.pop %v1138
    %v1145 = vmul.f32 1.0, %v1144
    %v1146 = vrcp.pop %v1139
    %v1147 = vmul.f32 1.0, %v1146
    %v1148 = vmul.f32 %v1120, %v1141
    %v1149 = vmul.f32 %v1121, %v1143
    %v1150 = vmul.f32 %v1122, %v1145
    %v1151 = vmul.f32 %v1123, %v1147
    %v1152 = vld [vmem:[#allocation5 + $0x60] sm:$0xff]
    %v1153 = vld [vmem:[#allocation5 + $0x68] sm:$0xff]
    %v1154 = vld [vmem:[#allocation5 + $0x70] sm:$0xff]
    %v1155 = vld [vmem:[#allocation5 + $0x78] sm:$0xff]
    %v1156 = vld [vmem:[#allocation5 + $0x80] sm:$0xff]
    %v1157 = vld [vmem:[#allocation5 + $0x88] sm:$0xff]
    %v1158 = vld [vmem:[#allocation5 + $0x90] sm:$0xff]
    %v1159 = vld [vmem:[#allocation5 + $0x98] sm:$0xff]
    %v1160 = vld [vmem:[#allocation5 + $0xa0] sm:$0xff]
    %v1161 = vld [vmem:[#allocation5 + $0xa8] sm:$0xff]
    %v1162 = vld [vmem:[#allocation5 + $0xb0] sm:$0xff]
    %v1163 = vld [vmem:[#allocation5 + $0xb8] sm:$0xff]
    %v1164 = vld [vmem:[#allocation5 + $0xc0] sm:$0xff]
    %v1165 = vld [vmem:[#allocation5 + $0xc8] sm:$0xff]
    %v1166 = vld [vmem:[#allocation5 + $0xd0] sm:$0xff]
    %v1167 = vld [vmem:[#allocation5 + $0xd8] sm:$0xff]
    %v1168 = vld [vmem:[#allocation5 + $0xe0] sm:$0xff]
    %v1169 = vld [vmem:[#allocation5 + $0xe8] sm:$0xff]
    %v1170 = vld [vmem:[#allocation5 + $0xf0] sm:$0xff]
    %v1171 = vld [vmem:[#allocation5 + $0xf8] sm:$0xff]
    %v1172 = vld [vmem:[#allocation5 + $0x100] sm:$0xff]
    %v1173 = vld [vmem:[#allocation5 + $0x108] sm:$0xff]
    %v1174 = vld [vmem:[#allocation5 + $0x110] sm:$0xff]
    %v1175 = vld [vmem:[#allocation5 + $0x118] sm:$0xff]
    %v1176 = vld [vmem:[#allocation5 + $0x120] sm:$0xff]
    %v1177 = vld [vmem:[#allocation5 + $0x128] sm:$0xff]
    %v1178 = vld [vmem:[#allocation5 + $0x130] sm:$0xff]
    %v1179 = vld [vmem:[#allocation5 + $0x138] sm:$0xff]
    %v1180 = vld [vmem:[#allocation5 + $0x140] sm:$0xff]
    %v1181 = vld [vmem:[#allocation5 + $0x148] sm:$0xff]
    %v1182 = vld [vmem:[#allocation5 + $0x150] sm:$0xff]
    %v1183 = vld [vmem:[#allocation5 + $0x158] sm:$0xff]
    %v1184 = vld [vmem:[#allocation5 + $0x160] sm:$0xff]
    %v1185 = vld [vmem:[#allocation5 + $0x168] sm:$0xff]
    %v1186 = vld [vmem:[#allocation5 + $0x170] sm:$0xff]
    %v1187 = vld [vmem:[#allocation5 + $0x178] sm:$0xff]
    %v1188 = vld [vmem:[#allocation5 + $0x180] sm:$0xff]
    %v1189 = vld [vmem:[#allocation5 + $0x188] sm:$0xff]
    %v1190 = vld [vmem:[#allocation5 + $0x190] sm:$0xff]
    %v1191 = vld [vmem:[#allocation5 + $0x198] sm:$0xff]
    %v1192 = vld [vmem:[#allocation5 + $0x1a0] sm:$0xff]
    %v1193 = vld [vmem:[#allocation5 + $0x1a8] sm:$0xff]
    %v1194 = vld [vmem:[#allocation5 + $0x1b0] sm:$0xff]
    %v1195 = vld [vmem:[#allocation5 + $0x1b8] sm:$0xff]
    %v1196 = vld [vmem:[#allocation5 + $0x1c0] sm:$0xff]
    %v1197 = vld [vmem:[#allocation5 + $0x1c8] sm:$0xff]
    %v1198 = vld [vmem:[#allocation5 + $0x1d0] sm:$0xff]
    %v1199 = vld [vmem:[#allocation5 + $0x1d8] sm:$0xff]
    %v1200 = vld [vmem:[#allocation5 + $0x1e0] sm:$0xff]
    %v1201 = vld [vmem:[#allocation5 + $0x1e8] sm:$0xff]
    %v1202 = vld [vmem:[#allocation5 + $0x1f0] sm:$0xff]
    %v1203 = vld [vmem:[#allocation5 + $0x1f8] sm:$0xff]
    %v1204 = vld [vmem:[#allocation5 + $0x200] sm:$0xff]
    %v1205 = vld [vmem:[#allocation5 + $0x208] sm:$0xff]
    %v1206 = vld [vmem:[#allocation5 + $0x210] sm:$0xff]
    %v1207 = vld [vmem:[#allocation5 + $0x218] sm:$0xff]
    %v1208 = vld [vmem:[#allocation5 + $0x220] sm:$0xff]
    %v1209 = vld [vmem:[#allocation5 + $0x228] sm:$0xff]
    %v1210 = vld [vmem:[#allocation5 + $0x230] sm:$0xff]
    %v1211 = vld [vmem:[#allocation5 + $0x238] sm:$0xff]
    %v1212 = vld [vmem:[#allocation5 + $0x240] sm:$0xff]
    %v1213 = vld [vmem:[#allocation5 + $0x248] sm:$0xff]
    %v1214 = vld [vmem:[#allocation5 + $0x250] sm:$0xff]
    %v1215 = vld [vmem:[#allocation5 + $0x258] sm:$0xff]
    %v1216 = vld [vmem:[#allocation5 + $0x260] sm:$0xff]
    %v1217 = vld [vmem:[#allocation5 + $0x268] sm:$0xff]
    %v1218 = vld [vmem:[#allocation5 + $0x270] sm:$0xff]
    %v1219 = vld [vmem:[#allocation5 + $0x278] sm:$0xff]
    %v1220 = vld [vmem:[#allocation5 + $0x280] sm:$0xff]
    %v1221 = vld [vmem:[#allocation5 + $0x288] sm:$0xff]
    %v1222 = vld [vmem:[#allocation5 + $0x290] sm:$0xff]
    %v1223 = vld [vmem:[#allocation5 + $0x298] sm:$0xff]
    %v1224 = vld [vmem:[#allocation5 + $0x2a0] sm:$0xff]
    %v1225 = vld [vmem:[#allocation5 + $0x2a8] sm:$0xff]
    %v1226 = vld [vmem:[#allocation5 + $0x2b0] sm:$0xff]
    %v1227 = vld [vmem:[#allocation5 + $0x2b8] sm:$0xff]
    %v1228 = vld [vmem:[#allocation5 + $0x2c0] sm:$0xff]
    %v1229 = vld [vmem:[#allocation5 + $0x2c8] sm:$0xff]
    %v1230 = vld [vmem:[#allocation5 + $0x2d0] sm:$0xff]
    %v1231 = vld [vmem:[#allocation5 + $0x2d8] sm:$0xff]
    %v1232 = vld [vmem:[#allocation5 + $0x2e0] sm:$0xff]
    %v1233 = vld [vmem:[#allocation5 + $0x2e8] sm:$0xff]
    %v1234 = vld [vmem:[#allocation5 + $0x2f0] sm:$0xff]
    %v1235 = vld [vmem:[#allocation5 + $0x2f8] sm:$0xff]
    %v1236 = vld [vmem:[#allocation5 + $0x300] sm:$0xff]
    %v1237 = vld [vmem:[#allocation5 + $0x308] sm:$0xff]
    %v1238 = vld [vmem:[#allocation5 + $0x310] sm:$0xff]
    %v1239 = vld [vmem:[#allocation5 + $0x318] sm:$0xff]
    %v1240 = vld [vmem:[#allocation5 + $0x320] sm:$0xff]
    %v1241 = vld [vmem:[#allocation5 + $0x328] sm:$0xff]
    %v1242 = vld [vmem:[#allocation5 + $0x330] sm:$0xff]
    %v1243 = vld [vmem:[#allocation5 + $0x338] sm:$0xff]
    %v1244 = vld [vmem:[#allocation5 + $0x340] sm:$0xff]
    %v1245 = vld [vmem:[#allocation5 + $0x348] sm:$0xff]
    %v1246 = vld [vmem:[#allocation5 + $0x350] sm:$0xff]
    %v1247 = vld [vmem:[#allocation5 + $0x358] sm:$0xff]
    %v1248 = vld [vmem:[#allocation5 + $0x360] sm:$0xff]
    %v1249 = vld [vmem:[#allocation5 + $0x368] sm:$0xff]
    %v1250 = vld [vmem:[#allocation5 + $0x370] sm:$0xff]
    %v1251 = vld [vmem:[#allocation5 + $0x378] sm:$0xff]
    %v1252 = vld [vmem:[#allocation5 + $0x380] sm:$0xff]
    %v1253 = vld [vmem:[#allocation5 + $0x388] sm:$0xff]
    %v1254 = vld [vmem:[#allocation5 + $0x390] sm:$0xff]
    %v1255 = vld [vmem:[#allocation5 + $0x398] sm:$0xff]
    %v1256 = vld [vmem:[#allocation5 + $0x3a0] sm:$0xff]
    %v1257 = vld [vmem:[#allocation5 + $0x3a8] sm:$0xff]
    %v1258 = vld [vmem:[#allocation5 + $0x3b0] sm:$0xff]
    %v1259 = vld [vmem:[#allocation5 + $0x3b8] sm:$0xff]
    %v1260 = vld [vmem:[#allocation5 + $0x3c0] sm:$0xff]
    %v1261 = vld [vmem:[#allocation5 + $0x3c8] sm:$0xff]
    %v1262 = vld [vmem:[#allocation5 + $0x3d0] sm:$0xff]
    %v1263 = vld [vmem:[#allocation5 + $0x3d8] sm:$0xff]
    %v1264 = vld [vmem:[#allocation5 + $0x3e0] sm:$0xff]
    %v1265 = vld [vmem:[#allocation5 + $0x3e8] sm:$0xff]
    %v1266 = vld [vmem:[#allocation5 + $0x3f0] sm:$0xff]
    %v1267 = vld [vmem:[#allocation5 + $0x3f8] sm:$0xff]
    %v1268 = vld [vmem:[#allocation5 + $0x400] sm:$0xff]
    %v1269 = vld [vmem:[#allocation5 + $0x408] sm:$0xff]
    %v1270 = vld [vmem:[#allocation5 + $0x410] sm:$0xff]
    %v1271 = vld [vmem:[#allocation5 + $0x418] sm:$0xff]
    %v1272 = vld [vmem:[#allocation5 + $0x420] sm:$0xff]
    %v1273 = vld [vmem:[#allocation5 + $0x428] sm:$0xff]
    %v1274 = vld [vmem:[#allocation5 + $0x430] sm:$0xff]
    %v1275 = vld [vmem:[#allocation5 + $0x438] sm:$0xff]
    %v1276 = vld [vmem:[#allocation5 + $0x440] sm:$0xff]
    %v1277 = vld [vmem:[#allocation5 + $0x448] sm:$0xff]
    %v1278 = vld [vmem:[#allocation5 + $0x450] sm:$0xff]
    %v1279 = vld [vmem:[#allocation5 + $0x458] sm:$0xff]
    %v1280 = vld [vmem:[#allocation5 + $0x460] sm:$0xff]
    %v1281 = vld [vmem:[#allocation5 + $0x468] sm:$0xff]
    %v1282 = vld [vmem:[#allocation5 + $0x470] sm:$0xff]
    %v1283 = vld [vmem:[#allocation5 + $0x478] sm:$0xff]
    %v1284 = vld [vmem:[#allocation5 + $0x480] sm:$0xff]
    %v1285 = vld [vmem:[#allocation5 + $0x488] sm:$0xff]
    %v1286 = vld [vmem:[#allocation5 + $0x490] sm:$0xff]
    %v1287 = vld [vmem:[#allocation5 + $0x498] sm:$0xff]
    %v1288 = vld [vmem:[#allocation5 + $0x4a0] sm:$0xff]
    %v1289 = vld [vmem:[#allocation5 + $0x4a8] sm:$0xff]
    %v1290 = vld [vmem:[#allocation5 + $0x4b0] sm:$0xff]
    %v1291 = vld [vmem:[#allocation5 + $0x4b8] sm:$0xff]
    %v1292 = vld [vmem:[#allocation5 + $0x4c0] sm:$0xff]
    %v1293 = vld [vmem:[#allocation5 + $0x4c8] sm:$0xff]
    %v1294 = vld [vmem:[#allocation5 + $0x4d0] sm:$0xff]
    %v1295 = vld [vmem:[#allocation5 + $0x4d8] sm:$0xff]
    %v1296 = vld [vmem:[#allocation5 + $0x4e0] sm:$0xff]
    %v1297 = vld [vmem:[#allocation5 + $0x4e8] sm:$0xff]
    %v1298 = vld [vmem:[#allocation5 + $0x4f0] sm:$0xff]
    %v1299 = vld [vmem:[#allocation5 + $0x4f8] sm:$0xff]
    %v1300 = vld [vmem:[#allocation5 + $0x500] sm:$0xff]
    %v1301 = vld [vmem:[#allocation5 + $0x508] sm:$0xff]
    %v1302 = vld [vmem:[#allocation5 + $0x510] sm:$0xff]
    %v1303 = vld [vmem:[#allocation5 + $0x518] sm:$0xff]
    %v1304 = vld [vmem:[#allocation5 + $0x520] sm:$0xff]
    %v1305 = vld [vmem:[#allocation5 + $0x528] sm:$0xff]
    %v1306 = vld [vmem:[#allocation5 + $0x530] sm:$0xff]
    %v1307 = vld [vmem:[#allocation5 + $0x538] sm:$0xff]
    %v1308 = vld [vmem:[#allocation5 + $0x540] sm:$0xff]
    %v1309 = vld [vmem:[#allocation5 + $0x548] sm:$0xff]
    %v1310 = vld [vmem:[#allocation5 + $0x550] sm:$0xff]
    %v1311 = vld [vmem:[#allocation5 + $0x558] sm:$0xff]
    %v1312 = vld [vmem:[#allocation5 + $0x560] sm:$0xff]
    %v1313 = vld [vmem:[#allocation5 + $0x568] sm:$0xff]
    %v1314 = vld [vmem:[#allocation5 + $0x570] sm:$0xff]
    %v1315 = vld [vmem:[#allocation5 + $0x578] sm:$0xff]
    %v1316 = vld [vmem:[#allocation5 + $0x580] sm:$0xff]
    %v1317 = vld [vmem:[#allocation5 + $0x588] sm:$0xff]
    %v1318 = vld [vmem:[#allocation5 + $0x590] sm:$0xff]
    %v1319 = vld [vmem:[#allocation5 + $0x598] sm:$0xff]
    %v1320 = vld [vmem:[#allocation5 + $0x5a0] sm:$0xff]
    %v1321 = vld [vmem:[#allocation5 + $0x5a8] sm:$0xff]
    %v1322 = vld [vmem:[#allocation5 + $0x5b0] sm:$0xff]
    %v1323 = vld [vmem:[#allocation5 + $0x5b8] sm:$0xff]
    %v1324 = vld [vmem:[#allocation5 + $0x5c0] sm:$0xff]
    %v1325 = vld [vmem:[#allocation5 + $0x5c8] sm:$0xff]
    %v1326 = vld [vmem:[#allocation5 + $0x5d0] sm:$0xff]
    %v1327 = vld [vmem:[#allocation5 + $0x5d8] sm:$0xff]
    %v1328 = vld [vmem:[#allocation5 + $0x5e0] sm:$0xff]
    %v1329 = vld [vmem:[#allocation5 + $0x5e8] sm:$0xff]
    %v1330 = vld [vmem:[#allocation5 + $0x5f0] sm:$0xff]
    %v1331 = vld [vmem:[#allocation5 + $0x5f8] sm:$0xff]
    %v1332 = vld [vmem:[#allocation5 + $0x600] sm:$0xff]
    %v1333 = vld [vmem:[#allocation5 + $0x608] sm:$0xff]
    %v1334 = vld [vmem:[#allocation5 + $0x610] sm:$0xff]
    %v1335 = vld [vmem:[#allocation5 + $0x618] sm:$0xff]
    %v1336 = vld [vmem:[#allocation5 + $0x620] sm:$0xff]
    %v1337 = vld [vmem:[#allocation5 + $0x628] sm:$0xff]
    %v1338 = vld [vmem:[#allocation5 + $0x630] sm:$0xff]
    %v1339 = vld [vmem:[#allocation5 + $0x638] sm:$0xff]
    %v1340 = vld [vmem:[#allocation5 + $0x640] sm:$0xff]
    %v1341 = vld [vmem:[#allocation5 + $0x648] sm:$0xff]
    %v1342 = vld [vmem:[#allocation5 + $0x650] sm:$0xff]
    %v1343 = vld [vmem:[#allocation5 + $0x658] sm:$0xff]
    %s1344 = scalar_lea.vmem [#allocation8], 3
    %v1345 = vld [vmem:[%s1344] ss:$8 sm:$0xf]
    %v1346 = vld [vmem:[%s1344] ss:$8 sm:$0x30]
    %v1347 = vor.u32 %v1345, %v1346
    %v1348 = vpack.c.bf16 %v1148, %v1148
    %v1349 = vpack.c.bf16 %v1149, %v1149
    %v1350 = vpack.c.bf16 %v1150, %v1150
    %v1351 = vpack.c.bf16 %v1151, %v1151
    %v1353 = vlaneseq
    %v1354 = vshrl.u32 %v1353, 7
    %v1355 = vsub.s32 0, %v1354
    %v1356 = vrot.slane %v1347, %v1355
    %v1357 = vlaneseq
    %v1358 = vshrl.u32 %v1357, 7
    %v1359 = vsub.s32 1, %v1358
    %v1360 = vrot.slane %v1347, %v1359
    %v1361 = vlaneseq
    %v1362 = vshrl.u32 %v1361, 7
    %v1363 = vsub.s32 2, %v1362
    %v1364 = vrot.slane %v1347, %v1363
    %v1365 = vlaneseq
    %v1366 = vshrl.u32 %v1365, 7
    %v1367 = vsub.s32 3, %v1366
    %v1368 = vrot.slane %v1347, %v1367
    %v1369 = vlaneseq
    %v1370 = vshrl.u32 %v1369, 7
    %v1371 = vsub.s32 4, %v1370
    %v1372 = vrot.slane %v1347, %v1371
    %v1373 = vlaneseq
    %v1374 = vshrl.u32 %v1373, 7
    %v1375 = vsub.s32 5, %v1374
    %v1376 = vrot.slane %v1347, %v1375
    %v1575 = vunpack.c.l.b16 %v1152
    %v1576 = vunpack.c.h.b16 %v1152
    %v1577 = vunpack.c.l.b16 %v1153
    %v1578 = vunpack.c.h.b16 %v1153
    %v1579 = vunpack.c.l.b16 %v1154
    %v1580 = vunpack.c.h.b16 %v1154
    %v1581 = vunpack.c.l.b16 %v1155
    %v1582 = vunpack.c.h.b16 %v1155
    %v1583 = vunpack.c.l.b16 %v1156
    %v1584 = vunpack.c.h.b16 %v1156
    %v1585 = vunpack.c.l.b16 %v1157
    %v1586 = vunpack.c.h.b16 %v1157
    %v1587 = vunpack.c.l.b16 %v1158
    %v1588 = vunpack.c.h.b16 %v1158
    %v1589 = vunpack.c.l.b16 %v1159
    %v1590 = vunpack.c.h.b16 %v1159
    %v1591 = vunpack.c.l.b16 %v1160
    %v1592 = vunpack.c.h.b16 %v1160
    %v1593 = vunpack.c.l.b16 %v1161
    %v1594 = vunpack.c.h.b16 %v1161
    %v1595 = vunpack.c.l.b16 %v1162
    %v1596 = vunpack.c.h.b16 %v1162
    %v1597 = vunpack.c.l.b16 %v1163
    %v1598 = vunpack.c.h.b16 %v1163
    %v1599 = vunpack.c.l.b16 %v1164
    %v1600 = vunpack.c.h.b16 %v1164
    %v1601 = vunpack.c.l.b16 %v1165
    %v1602 = vunpack.c.h.b16 %v1165
    %v1603 = vunpack.c.l.b16 %v1166
    %v1604 = vunpack.c.h.b16 %v1166
    %v1605 = vunpack.c.l.b16 %v1167
    %v1606 = vunpack.c.h.b16 %v1167
    %v1607 = vunpack.c.l.b16 %v1168
    %v1608 = vunpack.c.h.b16 %v1168
    %v1609 = vunpack.c.l.b16 %v1169
    %v1610 = vunpack.c.h.b16 %v1169
    %v1611 = vunpack.c.l.b16 %v1170
    %v1612 = vunpack.c.h.b16 %v1170
    %v1613 = vunpack.c.l.b16 %v1171
    %v1614 = vunpack.c.h.b16 %v1171
    %v1615 = vunpack.c.l.b16 %v1172
    %v1616 = vunpack.c.h.b16 %v1172
    %v1617 = vunpack.c.l.b16 %v1173
    %v1618 = vunpack.c.h.b16 %v1173
    %v1619 = vunpack.c.l.b16 %v1174
    %v1620 = vunpack.c.h.b16 %v1174
    %v1621 = vunpack.c.l.b16 %v1175
    %v1622 = vunpack.c.h.b16 %v1175
    %v1623 = vunpack.c.l.b16 %v1176
    %v1624 = vunpack.c.h.b16 %v1176
    %v1625 = vunpack.c.l.b16 %v1177
    %v1626 = vunpack.c.h.b16 %v1177
    %v1627 = vunpack.c.l.b16 %v1178
    %v1628 = vunpack.c.h.b16 %v1178
    %v1629 = vunpack.c.l.b16 %v1179
    %v1630 = vunpack.c.h.b16 %v1179
    %v1631 = vunpack.c.l.b16 %v1180
    %v1632 = vunpack.c.h.b16 %v1180
    %v1633 = vunpack.c.l.b16 %v1181
    %v1634 = vunpack.c.h.b16 %v1181
    %v1635 = vunpack.c.l.b16 %v1182
    %v1636 = vunpack.c.h.b16 %v1182
    %v1637 = vunpack.c.l.b16 %v1183
    %v1638 = vunpack.c.h.b16 %v1183
    %v1639 = vunpack.c.l.b16 %v1184
    %v1640 = vunpack.c.h.b16 %v1184
    %v1641 = vunpack.c.l.b16 %v1185
    %v1642 = vunpack.c.h.b16 %v1185
    %v1643 = vunpack.c.l.b16 %v1186
    %v1644 = vunpack.c.h.b16 %v1186
    %v1645 = vunpack.c.l.b16 %v1187
    %v1646 = vunpack.c.h.b16 %v1187
    %v1647 = vunpack.c.l.b16 %v1188
    %v1648 = vunpack.c.h.b16 %v1188
    %v1649 = vunpack.c.l.b16 %v1189
    %v1650 = vunpack.c.h.b16 %v1189
    %v1651 = vunpack.c.l.b16 %v1190
    %v1652 = vunpack.c.h.b16 %v1190
    %v1653 = vunpack.c.l.b16 %v1191
    %v1654 = vunpack.c.h.b16 %v1191
    %v1655 = vunpack.c.l.b16 %v1192
    %v1656 = vunpack.c.h.b16 %v1192
    %v1657 = vunpack.c.l.b16 %v1193
    %v1658 = vunpack.c.h.b16 %v1193
    %v1659 = vunpack.c.l.b16 %v1194
    %v1660 = vunpack.c.h.b16 %v1194
    %v1661 = vunpack.c.l.b16 %v1195
    %v1662 = vunpack.c.h.b16 %v1195
    %v1663 = vunpack.c.l.b16 %v1196
    %v1664 = vunpack.c.h.b16 %v1196
    %v1665 = vunpack.c.l.b16 %v1197
    %v1666 = vunpack.c.h.b16 %v1197
    %v1667 = vunpack.c.l.b16 %v1198
    %v1668 = vunpack.c.h.b16 %v1198
    %v1669 = vunpack.c.l.b16 %v1199
    %v1670 = vunpack.c.h.b16 %v1199
    %v1671 = vunpack.c.l.b16 %v1200
    %v1672 = vunpack.c.h.b16 %v1200
    %v1673 = vunpack.c.l.b16 %v1201
    %v1674 = vunpack.c.h.b16 %v1201
    %v1675 = vunpack.c.l.b16 %v1202
    %v1676 = vunpack.c.h.b16 %v1202
    %v1677 = vunpack.c.l.b16 %v1203
    %v1678 = vunpack.c.h.b16 %v1203
    %v1679 = vunpack.c.l.b16 %v1204
    %v1680 = vunpack.c.h.b16 %v1204
    %v1681 = vunpack.c.l.b16 %v1205
    %v1682 = vunpack.c.h.b16 %v1205
    %v1683 = vunpack.c.l.b16 %v1206
    %v1684 = vunpack.c.h.b16 %v1206
    %v1685 = vunpack.c.l.b16 %v1207
    %v1686 = vunpack.c.h.b16 %v1207
    %v1687 = vunpack.c.l.b16 %v1208
    %v1688 = vunpack.c.h.b16 %v1208
    %v1689 = vunpack.c.l.b16 %v1209
    %v1690 = vunpack.c.h.b16 %v1209
    %v1691 = vunpack.c.l.b16 %v1210
    %v1692 = vunpack.c.h.b16 %v1210
    %v1693 = vunpack.c.l.b16 %v1211
    %v1694 = vunpack.c.h.b16 %v1211
    %v1695 = vunpack.c.l.b16 %v1212
    %v1696 = vunpack.c.h.b16 %v1212
    %v1697 = vunpack.c.l.b16 %v1213
    %v1698 = vunpack.c.h.b16 %v1213
    %v1699 = vunpack.c.l.b16 %v1214
    %v1700 = vunpack.c.h.b16 %v1214
    %v1701 = vunpack.c.l.b16 %v1215
    %v1702 = vunpack.c.h.b16 %v1215
    %v1703 = vunpack.c.l.b16 %v1216
    %v1704 = vunpack.c.h.b16 %v1216
    %v1705 = vunpack.c.l.b16 %v1217
    %v1706 = vunpack.c.h.b16 %v1217
    %v1707 = vunpack.c.l.b16 %v1218
    %v1708 = vunpack.c.h.b16 %v1218
    %v1709 = vunpack.c.l.b16 %v1219
    %v1710 = vunpack.c.h.b16 %v1219
    %v1711 = vunpack.c.l.b16 %v1220
    %v1712 = vunpack.c.h.b16 %v1220
    %v1713 = vunpack.c.l.b16 %v1221
    %v1714 = vunpack.c.h.b16 %v1221
    %v1715 = vunpack.c.l.b16 %v1222
    %v1716 = vunpack.c.h.b16 %v1222
    %v1717 = vunpack.c.l.b16 %v1223
    %v1718 = vunpack.c.h.b16 %v1223
    %v1719 = vunpack.c.l.b16 %v1224
    %v1720 = vunpack.c.h.b16 %v1224
    %v1721 = vunpack.c.l.b16 %v1225
    %v1722 = vunpack.c.h.b16 %v1225
    %v1723 = vunpack.c.l.b16 %v1226
    %v1724 = vunpack.c.h.b16 %v1226
    %v1725 = vunpack.c.l.b16 %v1227
    %v1726 = vunpack.c.h.b16 %v1227
    %v1727 = vunpack.c.l.b16 %v1228
    %v1728 = vunpack.c.h.b16 %v1228
    %v1729 = vunpack.c.l.b16 %v1229
    %v1730 = vunpack.c.h.b16 %v1229
    %v1731 = vunpack.c.l.b16 %v1230
    %v1732 = vunpack.c.h.b16 %v1230
    %v1733 = vunpack.c.l.b16 %v1231
    %v1734 = vunpack.c.h.b16 %v1231
    %v1735 = vunpack.c.l.b16 %v1232
    %v1736 = vunpack.c.h.b16 %v1232
    %v1737 = vunpack.c.l.b16 %v1233
    %v1738 = vunpack.c.h.b16 %v1233
    %v1739 = vunpack.c.l.b16 %v1234
    %v1740 = vunpack.c.h.b16 %v1234
    %v1741 = vunpack.c.l.b16 %v1235
    %v1742 = vunpack.c.h.b16 %v1235
    %v1743 = vunpack.c.l.b16 %v1236
    %v1744 = vunpack.c.h.b16 %v1236
    %v1745 = vunpack.c.l.b16 %v1237
    %v1746 = vunpack.c.h.b16 %v1237
    %v1747 = vunpack.c.l.b16 %v1238
    %v1748 = vunpack.c.h.b16 %v1238
    %v1749 = vunpack.c.l.b16 %v1239
    %v1750 = vunpack.c.h.b16 %v1239
    %v1751 = vunpack.c.l.b16 %v1240
    %v1752 = vunpack.c.h.b16 %v1240
    %v1753 = vunpack.c.l.b16 %v1241
    %v1754 = vunpack.c.h.b16 %v1241
    %v1755 = vunpack.c.l.b16 %v1242
    %v1756 = vunpack.c.h.b16 %v1242
    %v1757 = vunpack.c.l.b16 %v1243
    %v1758 = vunpack.c.h.b16 %v1243
    %v1759 = vunpack.c.l.b16 %v1244
    %v1760 = vunpack.c.h.b16 %v1244
    %v1761 = vunpack.c.l.b16 %v1245
    %v1762 = vunpack.c.h.b16 %v1245
    %v1763 = vunpack.c.l.b16 %v1246
    %v1764 = vunpack.c.h.b16 %v1246
    %v1765 = vunpack.c.l.b16 %v1247
    %v1766 = vunpack.c.h.b16 %v1247
    %v1767 = vunpack.c.l.b16 %v1248
    %v1768 = vunpack.c.h.b16 %v1248
    %v1769 = vunpack.c.l.b16 %v1249
    %v1770 = vunpack.c.h.b16 %v1249
    %v1771 = vunpack.c.l.b16 %v1250
    %v1772 = vunpack.c.h.b16 %v1250
    %v1773 = vunpack.c.l.b16 %v1251
    %v1774 = vunpack.c.h.b16 %v1251
    %v1775 = vunpack.c.l.b16 %v1252
    %v1776 = vunpack.c.h.b16 %v1252
    %v1777 = vunpack.c.l.b16 %v1253
    %v1778 = vunpack.c.h.b16 %v1253
    %v1779 = vunpack.c.l.b16 %v1254
    %v1780 = vunpack.c.h.b16 %v1254
    %v1781 = vunpack.c.l.b16 %v1255
    %v1782 = vunpack.c.h.b16 %v1255
    %v1783 = vunpack.c.l.b16 %v1256
    %v1784 = vunpack.c.h.b16 %v1256
    %v1785 = vunpack.c.l.b16 %v1257
    %v1786 = vunpack.c.h.b16 %v1257
    %v1787 = vunpack.c.l.b16 %v1258
    %v1788 = vunpack.c.h.b16 %v1258
    %v1789 = vunpack.c.l.b16 %v1259
    %v1790 = vunpack.c.h.b16 %v1259
    %v1791 = vunpack.c.l.b16 %v1260
    %v1792 = vunpack.c.h.b16 %v1260
    %v1793 = vunpack.c.l.b16 %v1261
    %v1794 = vunpack.c.h.b16 %v1261
    %v1795 = vunpack.c.l.b16 %v1262
    %v1796 = vunpack.c.h.b16 %v1262
    %v1797 = vunpack.c.l.b16 %v1263
    %v1798 = vunpack.c.h.b16 %v1263
    %v1799 = vunpack.c.l.b16 %v1264
    %v1800 = vunpack.c.h.b16 %v1264
    %v1801 = vunpack.c.l.b16 %v1265
    %v1802 = vunpack.c.h.b16 %v1265
    %v1803 = vunpack.c.l.b16 %v1266
    %v1804 = vunpack.c.h.b16 %v1266
    %v1805 = vunpack.c.l.b16 %v1267
    %v1806 = vunpack.c.h.b16 %v1267
    %v1807 = vunpack.c.l.b16 %v1268
    %v1808 = vunpack.c.h.b16 %v1268
    %v1809 = vunpack.c.l.b16 %v1269
    %v1810 = vunpack.c.h.b16 %v1269
    %v1811 = vunpack.c.l.b16 %v1270
    %v1812 = vunpack.c.h.b16 %v1270
    %v1813 = vunpack.c.l.b16 %v1271
    %v1814 = vunpack.c.h.b16 %v1271
    %v1815 = vunpack.c.l.b16 %v1272
    %v1816 = vunpack.c.h.b16 %v1272
    %v1817 = vunpack.c.l.b16 %v1273
    %v1818 = vunpack.c.h.b16 %v1273
    %v1819 = vunpack.c.l.b16 %v1274
    %v1820 = vunpack.c.h.b16 %v1274
    %v1821 = vunpack.c.l.b16 %v1275
    %v1822 = vunpack.c.h.b16 %v1275
    %v1823 = vunpack.c.l.b16 %v1276
    %v1824 = vunpack.c.h.b16 %v1276
    %v1825 = vunpack.c.l.b16 %v1277
    %v1826 = vunpack.c.h.b16 %v1277
    %v1827 = vunpack.c.l.b16 %v1278
    %v1828 = vunpack.c.h.b16 %v1278
    %v1829 = vunpack.c.l.b16 %v1279
    %v1830 = vunpack.c.h.b16 %v1279
    %v1831 = vunpack.c.l.b16 %v1280
    %v1832 = vunpack.c.h.b16 %v1280
    %v1833 = vunpack.c.l.b16 %v1281
    %v1834 = vunpack.c.h.b16 %v1281
    %v1835 = vunpack.c.l.b16 %v1282
    %v1836 = vunpack.c.h.b16 %v1282
    %v1837 = vunpack.c.l.b16 %v1283
    %v1838 = vunpack.c.h.b16 %v1283
    %v1839 = vunpack.c.l.b16 %v1284
    %v1840 = vunpack.c.h.b16 %v1284
    %v1841 = vunpack.c.l.b16 %v1285
    %v1842 = vunpack.c.h.b16 %v1285
    %v1843 = vunpack.c.l.b16 %v1286
    %v1844 = vunpack.c.h.b16 %v1286
    %v1845 = vunpack.c.l.b16 %v1287
    %v1846 = vunpack.c.h.b16 %v1287
    %v1847 = vunpack.c.l.b16 %v1288
    %v1848 = vunpack.c.h.b16 %v1288
    %v1849 = vunpack.c.l.b16 %v1289
    %v1850 = vunpack.c.h.b16 %v1289
    %v1851 = vunpack.c.l.b16 %v1290
    %v1852 = vunpack.c.h.b16 %v1290
    %v1853 = vunpack.c.l.b16 %v1291
    %v1854 = vunpack.c.h.b16 %v1291
    %v1855 = vunpack.c.l.b16 %v1292
    %v1856 = vunpack.c.h.b16 %v1292
    %v1857 = vunpack.c.l.b16 %v1293
    %v1858 = vunpack.c.h.b16 %v1293
    %v1859 = vunpack.c.l.b16 %v1294
    %v1860 = vunpack.c.h.b16 %v1294
    %v1861 = vunpack.c.l.b16 %v1295
    %v1862 = vunpack.c.h.b16 %v1295
    %v1863 = vunpack.c.l.b16 %v1296
    %v1864 = vunpack.c.h.b16 %v1296
    %v1865 = vunpack.c.l.b16 %v1297
    %v1866 = vunpack.c.h.b16 %v1297
    %v1867 = vunpack.c.l.b16 %v1298
    %v1868 = vunpack.c.h.b16 %v1298
    %v1869 = vunpack.c.l.b16 %v1299
    %v1870 = vunpack.c.h.b16 %v1299
    %v1871 = vunpack.c.l.b16 %v1300
    %v1872 = vunpack.c.h.b16 %v1300
    %v1873 = vunpack.c.l.b16 %v1301
    %v1874 = vunpack.c.h.b16 %v1301
    %v1875 = vunpack.c.l.b16 %v1302
    %v1876 = vunpack.c.h.b16 %v1302
    %v1877 = vunpack.c.l.b16 %v1303
    %v1878 = vunpack.c.h.b16 %v1303
    %v1879 = vunpack.c.l.b16 %v1304
    %v1880 = vunpack.c.h.b16 %v1304
    %v1881 = vunpack.c.l.b16 %v1305
    %v1882 = vunpack.c.h.b16 %v1305
    %v1883 = vunpack.c.l.b16 %v1306
    %v1884 = vunpack.c.h.b16 %v1306
    %v1885 = vunpack.c.l.b16 %v1307
    %v1886 = vunpack.c.h.b16 %v1307
    %v1887 = vunpack.c.l.b16 %v1308
    %v1888 = vunpack.c.h.b16 %v1308
    %v1889 = vunpack.c.l.b16 %v1309
    %v1890 = vunpack.c.h.b16 %v1309
    %v1891 = vunpack.c.l.b16 %v1310
    %v1892 = vunpack.c.h.b16 %v1310
    %v1893 = vunpack.c.l.b16 %v1311
    %v1894 = vunpack.c.h.b16 %v1311
    %v1895 = vunpack.c.l.b16 %v1312
    %v1896 = vunpack.c.h.b16 %v1312
    %v1897 = vunpack.c.l.b16 %v1313
    %v1898 = vunpack.c.h.b16 %v1313
    %v1899 = vunpack.c.l.b16 %v1314
    %v1900 = vunpack.c.h.b16 %v1314
    %v1901 = vunpack.c.l.b16 %v1315
    %v1902 = vunpack.c.h.b16 %v1315
    %v1903 = vunpack.c.l.b16 %v1316
    %v1904 = vunpack.c.h.b16 %v1316
    %v1905 = vunpack.c.l.b16 %v1317
    %v1906 = vunpack.c.h.b16 %v1317
    %v1907 = vunpack.c.l.b16 %v1318
    %v1908 = vunpack.c.h.b16 %v1318
    %v1909 = vunpack.c.l.b16 %v1319
    %v1910 = vunpack.c.h.b16 %v1319
    %v1911 = vunpack.c.l.b16 %v1320
    %v1912 = vunpack.c.h.b16 %v1320
    %v1913 = vunpack.c.l.b16 %v1321
    %v1914 = vunpack.c.h.b16 %v1321
    %v1915 = vunpack.c.l.b16 %v1322
    %v1916 = vunpack.c.h.b16 %v1322
    %v1917 = vunpack.c.l.b16 %v1323
    %v1918 = vunpack.c.h.b16 %v1323
    %v1919 = vunpack.c.l.b16 %v1324
    %v1920 = vunpack.c.h.b16 %v1324
    %v1921 = vunpack.c.l.b16 %v1325
    %v1922 = vunpack.c.h.b16 %v1325
    %v1923 = vunpack.c.l.b16 %v1326
    %v1924 = vunpack.c.h.b16 %v1326
    %v1925 = vunpack.c.l.b16 %v1327
    %v1926 = vunpack.c.h.b16 %v1327
    %v1927 = vunpack.c.l.b16 %v1328
    %v1928 = vunpack.c.h.b16 %v1328
    %v1929 = vunpack.c.l.b16 %v1329
    %v1930 = vunpack.c.h.b16 %v1329
    %v1931 = vunpack.c.l.b16 %v1330
    %v1932 = vunpack.c.h.b16 %v1330
    %v1933 = vunpack.c.l.b16 %v1331
    %v1934 = vunpack.c.h.b16 %v1331
    %v1935 = vunpack.c.l.b16 %v1332
    %v1936 = vunpack.c.h.b16 %v1332
    %v1937 = vunpack.c.l.b16 %v1333
    %v1938 = vunpack.c.h.b16 %v1333
    %v1939 = vunpack.c.l.b16 %v1334
    %v1940 = vunpack.c.h.b16 %v1334
    %v1941 = vunpack.c.l.b16 %v1335
    %v1942 = vunpack.c.h.b16 %v1335
    %v1943 = vunpack.c.l.b16 %v1336
    %v1944 = vunpack.c.h.b16 %v1336
    %v1945 = vunpack.c.l.b16 %v1337
    %v1946 = vunpack.c.h.b16 %v1337
    %v1947 = vunpack.c.l.b16 %v1338
    %v1948 = vunpack.c.h.b16 %v1338
    %v1949 = vunpack.c.l.b16 %v1339
    %v1950 = vunpack.c.h.b16 %v1339
    %v1951 = vunpack.c.l.b16 %v1340
    %v1952 = vunpack.c.h.b16 %v1340
    %v1953 = vunpack.c.l.b16 %v1341
    %v1954 = vunpack.c.h.b16 %v1341
    %v1955 = vunpack.c.l.b16 %v1342
    %v1956 = vunpack.c.h.b16 %v1342
    %v1957 = vunpack.c.l.b16 %v1343
    %v1958 = vunpack.c.h.b16 %v1343
    %v1959 = vpack.c.b16 %v1581, %v1575
    %v1960 = vpack.c.b16 %v1582, %v1576
    %v1961 = vpack.c.b16 %v1583, %v1577
    %v1962 = vpack.c.b16 %v1584, %v1578
    %v1963 = vpack.c.b16 %v1585, %v1579
    %v1964 = vpack.c.b16 %v1586, %v1580
    %v1965 = vpack.c.b16 %v1593, %v1587
    %v1966 = vpack.c.b16 %v1594, %v1588
    %v1967 = vpack.c.b16 %v1595, %v1589
    %v1968 = vpack.c.b16 %v1596, %v1590
    %v1969 = vpack.c.b16 %v1597, %v1591
    %v1970 = vpack.c.b16 %v1598, %v1592
    %v1971 = vpack.c.b16 %v1605, %v1599
    %v1972 = vpack.c.b16 %v1606, %v1600
    %v1973 = vpack.c.b16 %v1607, %v1601
    %v1974 = vpack.c.b16 %v1608, %v1602
    %v1975 = vpack.c.b16 %v1609, %v1603
    %v1976 = vpack.c.b16 %v1610, %v1604
    %v1977 = vpack.c.b16 %v1617, %v1611
    %v1978 = vpack.c.b16 %v1618, %v1612
    %v1979 = vpack.c.b16 %v1619, %v1613
    %v1980 = vpack.c.b16 %v1620, %v1614
    %v1981 = vpack.c.b16 %v1621, %v1615
    %v1982 = vpack.c.b16 %v1622, %v1616
    %v1983 = vpack.c.b16 %v1629, %v1623
    %v1984 = vpack.c.b16 %v1630, %v1624
    %v1985 = vpack.c.b16 %v1631, %v1625
    %v1986 = vpack.c.b16 %v1632, %v1626
    %v1987 = vpack.c.b16 %v1633, %v1627
    %v1988 = vpack.c.b16 %v1634, %v1628
    %v1989 = vpack.c.b16 %v1641, %v1635
    %v1990 = vpack.c.b16 %v1642, %v1636
    %v1991 = vpack.c.b16 %v1643, %v1637
    %v1992 = vpack.c.b16 %v1644, %v1638
    %v1993 = vpack.c.b16 %v1645, %v1639
    %v1994 = vpack.c.b16 %v1646, %v1640
    %v1995 = vpack.c.b16 %v1653, %v1647
    %v1996 = vpack.c.b16 %v1654, %v1648
    %v1997 = vpack.c.b16 %v1655, %v1649
    %v1998 = vpack.c.b16 %v1656, %v1650
    %v1999 = vpack.c.b16 %v1657, %v1651
    %v2000 = vpack.c.b16 %v1658, %v1652
    %v2001 = vpack.c.b16 %v1665, %v1659
    %v2002 = vpack.c.b16 %v1666, %v1660
    %v2003 = vpack.c.b16 %v1667, %v1661
    %v2004 = vpack.c.b16 %v1668, %v1662
    %v2005 = vpack.c.b16 %v1669, %v1663
    %v2006 = vpack.c.b16 %v1670, %v1664
    %v2007 = vpack.c.b16 %v1677, %v1671
    %v2008 = vpack.c.b16 %v1678, %v1672
    %v2009 = vpack.c.b16 %v1679, %v1673
    %v2010 = vpack.c.b16 %v1680, %v1674
    %v2011 = vpack.c.b16 %v1681, %v1675
    %v2012 = vpack.c.b16 %v1682, %v1676
    %v2013 = vpack.c.b16 %v1689, %v1683
    %v2014 = vpack.c.b16 %v1690, %v1684
    %v2015 = vpack.c.b16 %v1691, %v1685
    %v2016 = vpack.c.b16 %v1692, %v1686
    %v2017 = vpack.c.b16 %v1693, %v1687
    %v2018 = vpack.c.b16 %v1694, %v1688
    %v2019 = vpack.c.b16 %v1701, %v1695
    %v2020 = vpack.c.b16 %v1702, %v1696
    %v2021 = vpack.c.b16 %v1703, %v1697
    %v2022 = vpack.c.b16 %v1704, %v1698
    %v2023 = vpack.c.b16 %v1705, %v1699
    %v2024 = vpack.c.b16 %v1706, %v1700
    %v2025 = vpack.c.b16 %v1713, %v1707
    %v2026 = vpack.c.b16 %v1714, %v1708
    %v2027 = vpack.c.b16 %v1715, %v1709
    %v2028 = vpack.c.b16 %v1716, %v1710
    %v2029 = vpack.c.b16 %v1717, %v1711
    %v2030 = vpack.c.b16 %v1718, %v1712
    %v2031 = vpack.c.b16 %v1725, %v1719
    %v2032 = vpack.c.b16 %v1726, %v1720
    %v2033 = vpack.c.b16 %v1727, %v1721
    %v2034 = vpack.c.b16 %v1728, %v1722
    %v2035 = vpack.c.b16 %v1729, %v1723
    %v2036 = vpack.c.b16 %v1730, %v1724
    %v2037 = vpack.c.b16 %v1737, %v1731
    %v2038 = vpack.c.b16 %v1738, %v1732
    %v2039 = vpack.c.b16 %v1739, %v1733
    %v2040 = vpack.c.b16 %v1740, %v1734
    %v2041 = vpack.c.b16 %v1741, %v1735
    %v2042 = vpack.c.b16 %v1742, %v1736
    %v2043 = vpack.c.b16 %v1749, %v1743
    %v2044 = vpack.c.b16 %v1750, %v1744
    %v2045 = vpack.c.b16 %v1751, %v1745
    %v2046 = vpack.c.b16 %v1752, %v1746
    %v2047 = vpack.c.b16 %v1753, %v1747
    %v2048 = vpack.c.b16 %v1754, %v1748
    %v2049 = vpack.c.b16 %v1761, %v1755
    %v2050 = vpack.c.b16 %v1762, %v1756
    %v2051 = vpack.c.b16 %v1763, %v1757
    %v2052 = vpack.c.b16 %v1764, %v1758
    %v2053 = vpack.c.b16 %v1765, %v1759
    %v2054 = vpack.c.b16 %v1766, %v1760
    %v2055 = vpack.c.b16 %v1773, %v1767
    %v2056 = vpack.c.b16 %v1774, %v1768
    %v2057 = vpack.c.b16 %v1775, %v1769
    %v2058 = vpack.c.b16 %v1776, %v1770
    %v2059 = vpack.c.b16 %v1777, %v1771
    %v2060 = vpack.c.b16 %v1778, %v1772
    %v2061 = vpack.c.b16 %v1785, %v1779
    %v2062 = vpack.c.b16 %v1786, %v1780
    %v2063 = vpack.c.b16 %v1787, %v1781
    %v2064 = vpack.c.b16 %v1788, %v1782
    %v2065 = vpack.c.b16 %v1789, %v1783
    %v2066 = vpack.c.b16 %v1790, %v1784
    %v2067 = vpack.c.b16 %v1797, %v1791
    %v2068 = vpack.c.b16 %v1798, %v1792
    %v2069 = vpack.c.b16 %v1799, %v1793
    %v2070 = vpack.c.b16 %v1800, %v1794
    %v2071 = vpack.c.b16 %v1801, %v1795
    %v2072 = vpack.c.b16 %v1802, %v1796
    %v2073 = vpack.c.b16 %v1809, %v1803
    %v2074 = vpack.c.b16 %v1810, %v1804
    %v2075 = vpack.c.b16 %v1811, %v1805
    %v2076 = vpack.c.b16 %v1812, %v1806
    %v2077 = vpack.c.b16 %v1813, %v1807
    %v2078 = vpack.c.b16 %v1814, %v1808
    %v2079 = vpack.c.b16 %v1821, %v1815
    %v2080 = vpack.c.b16 %v1822, %v1816
    %v2081 = vpack.c.b16 %v1823, %v1817
    %v2082 = vpack.c.b16 %v1824, %v1818
    %v2083 = vpack.c.b16 %v1825, %v1819
    %v2084 = vpack.c.b16 %v1826, %v1820
    %v2085 = vpack.c.b16 %v1833, %v1827
    %v2086 = vpack.c.b16 %v1834, %v1828
    %v2087 = vpack.c.b16 %v1835, %v1829
    %v2088 = vpack.c.b16 %v1836, %v1830
    %v2089 = vpack.c.b16 %v1837, %v1831
    %v2090 = vpack.c.b16 %v1838, %v1832
    %v2091 = vpack.c.b16 %v1845, %v1839
    %v2092 = vpack.c.b16 %v1846, %v1840
    %v2093 = vpack.c.b16 %v1847, %v1841
    %v2094 = vpack.c.b16 %v1848, %v1842
    %v2095 = vpack.c.b16 %v1849, %v1843
    %v2096 = vpack.c.b16 %v1850, %v1844
    %v2097 = vpack.c.b16 %v1857, %v1851
    %v2098 = vpack.c.b16 %v1858, %v1852
    %v2099 = vpack.c.b16 %v1859, %v1853
    %v2100 = vpack.c.b16 %v1860, %v1854
    %v2101 = vpack.c.b16 %v1861, %v1855
    %v2102 = vpack.c.b16 %v1862, %v1856
    %v2103 = vpack.c.b16 %v1869, %v1863
    %v2104 = vpack.c.b16 %v1870, %v1864
    %v2105 = vpack.c.b16 %v1871, %v1865
    %v2106 = vpack.c.b16 %v1872, %v1866
    %v2107 = vpack.c.b16 %v1873, %v1867
    %v2108 = vpack.c.b16 %v1874, %v1868
    %v2109 = vpack.c.b16 %v1881, %v1875
    %v2110 = vpack.c.b16 %v1882, %v1876
    %v2111 = vpack.c.b16 %v1883, %v1877
    %v2112 = vpack.c.b16 %v1884, %v1878
    %v2113 = vpack.c.b16 %v1885, %v1879
    %v2114 = vpack.c.b16 %v1886, %v1880
    %v2115 = vpack.c.b16 %v1893, %v1887
    %v2116 = vpack.c.b16 %v1894, %v1888
    %v2117 = vpack.c.b16 %v1895, %v1889
    %v2118 = vpack.c.b16 %v1896, %v1890
    %v2119 = vpack.c.b16 %v1897, %v1891
    %v2120 = vpack.c.b16 %v1898, %v1892
    %v2121 = vpack.c.b16 %v1905, %v1899
    %v2122 = vpack.c.b16 %v1906, %v1900
    %v2123 = vpack.c.b16 %v1907, %v1901
    %v2124 = vpack.c.b16 %v1908, %v1902
    %v2125 = vpack.c.b16 %v1909, %v1903
    %v2126 = vpack.c.b16 %v1910, %v1904
    %v2127 = vpack.c.b16 %v1917, %v1911
    %v2128 = vpack.c.b16 %v1918, %v1912
    %v2129 = vpack.c.b16 %v1919, %v1913
    %v2130 = vpack.c.b16 %v1920, %v1914
    %v2131 = vpack.c.b16 %v1921, %v1915
    %v2132 = vpack.c.b16 %v1922, %v1916
    %v2133 = vpack.c.b16 %v1929, %v1923
    %v2134 = vpack.c.b16 %v1930, %v1924
    %v2135 = vpack.c.b16 %v1931, %v1925
    %v2136 = vpack.c.b16 %v1932, %v1926
    %v2137 = vpack.c.b16 %v1933, %v1927
    %v2138 = vpack.c.b16 %v1934, %v1928
    %v2139 = vpack.c.b16 %v1941, %v1935
    %v2140 = vpack.c.b16 %v1942, %v1936
    %v2141 = vpack.c.b16 %v1943, %v1937
    %v2142 = vpack.c.b16 %v1944, %v1938
    %v2143 = vpack.c.b16 %v1945, %v1939
    %v2144 = vpack.c.b16 %v1946, %v1940
    %v2145 = vpack.c.b16 %v1953, %v1947
    %v2146 = vpack.c.b16 %v1954, %v1948
    %v2147 = vpack.c.b16 %v1955, %v1949
    %v2148 = vpack.c.b16 %v1956, %v1950
    %v2149 = vpack.c.b16 %v1957, %v1951
    %v2150 = vpack.c.b16 %v1958, %v1952
    %2343 = vmatprep.subr.bf16.mxu0 %v2002
    %2344 = vmatpush1.bf16.msra.mxu0 %v2001
    %2345 = vmatprep.subr.bf16.mxu0 %v1996
    %2346 = vmatpush1.bf16.msra.mxu0 %v1995
    %2347 = vmatprep.subr.bf16.mxu0 %v1990
    %2348 = vmatpush1.bf16.msra.mxu0 %v1989
    %2349 = vmatprep.subr.bf16.mxu0 %v1984
    %2350 = vmatpush1.bf16.msra.mxu0 %v1983
    %2351 = vmatprep.subr.bf16.mxu0 %v1978
    %2352 = vmatpush1.bf16.msra.mxu0 %v1977
    %2353 = vmatprep.subr.bf16.mxu0 %v1972
    %2354 = vmatpush1.bf16.msra.mxu0 %v1971
    %2355 = vmatprep.subr.bf16.mxu0 %v1966
    %2356 = vmatpush1.bf16.msra.mxu0 %v1965
    %2357 = vmatprep.subr.bf16.mxu0 %v1960
    %2358 = vmatpush1.bf16.msra.mxu0 %v1959
    %2359 = vmatprep.subr.bf16.mxu0 %v2050
    %2360 = vmatpush2.bf16.msra.mxu0 %v2049
    %2361 = vmatprep.subr.bf16.mxu0 %v2044
    %2362 = vmatpush2.bf16.msra.mxu0 %v2043
    %2363 = vmatprep.subr.bf16.mxu0 %v2038
    %2364 = vmatpush2.bf16.msra.mxu0 %v2037
    %2365 = vmatprep.subr.bf16.mxu0 %v2032
    %2366 = vmatpush2.bf16.msra.mxu0 %v2031
    %2367 = vmatprep.subr.bf16.mxu0 %v2026
    %2368 = vmatpush2.bf16.msra.mxu0 %v2025
    %2369 = vmatprep.subr.bf16.mxu0 %v2020
    %2370 = vmatpush2.bf16.msra.mxu0 %v2019
    %2371 = vmatprep.subr.bf16.mxu0 %v2014
    %2372 = vmatpush2.bf16.msra.mxu0 %v2013
    %2373 = vmatprep.subr.bf16.mxu0 %v2008
    %2374 = vmatpush2.bf16.msra.mxu0 %v2007
    %2375 = vmatprep.mubr.bf16.mxu0 %v1349
    %2376 = vmatmul.mubr.bf16.gmra.mxu0 %v1348
    %v2377 = vpop.f32.mrf.mxu0
    %v2378 = vadd.f32 %v1356, %v2377
    %v2379 = vpop.f32.mrf.mxu0
    %v2380 = vadd.f32 %v1360, %v2379
    %v2381 = vpop.f32.mrf.mxu0
    %v2382 = vpop.f32.mrf.mxu0
    %2383 = vdwg.mxu0
    %2384 = vmatprep.subr.bf16.mxu0 %v2098
    %2385 = vmatpush1.bf16.msra.mxu0 %v2097
    %2386 = vmatprep.subr.bf16.mxu0 %v2092
    %2387 = vmatpush1.bf16.msra.mxu0 %v2091
    %2388 = vmatprep.subr.bf16.mxu0 %v2086
    %2389 = vmatpush1.bf16.msra.mxu0 %v2085
    %2390 = vmatprep.subr.bf16.mxu0 %v2080
    %2391 = vmatpush1.bf16.msra.mxu0 %v2079
    %2392 = vmatprep.subr.bf16.mxu0 %v2074
    %2393 = vmatpush1.bf16.msra.mxu0 %v2073
    %2394 = vmatprep.subr.bf16.mxu0 %v2068
    %2395 = vmatpush1.bf16.msra.mxu0 %v2067
    %2396 = vmatprep.subr.bf16.mxu0 %v2062
    %2397 = vmatpush1.bf16.msra.mxu0 %v2061
    %2398 = vmatprep.subr.bf16.mxu0 %v2056
    %2399 = vmatpush1.bf16.msra.mxu0 %v2055
    %2400 = vmatprep.subr.bf16.mxu0 %v2146
    %2401 = vmatpush2.bf16.msra.mxu0 %v2145
    %2402 = vmatprep.subr.bf16.mxu0 %v2140
    %2403 = vmatpush2.bf16.msra.mxu0 %v2139
    %2404 = vmatprep.subr.bf16.mxu0 %v2134
    %2405 = vmatpush2.bf16.msra.mxu0 %v2133
    %2406 = vmatprep.subr.bf16.mxu0 %v2128
    %2407 = vmatpush2.bf16.msra.mxu0 %v2127
    %2408 = vmatprep.subr.bf16.mxu0 %v2122
    %2409 = vmatpush2.bf16.msra.mxu0 %v2121
    %2410 = vmatprep.subr.bf16.mxu0 %v2116
    %2411 = vmatpush2.bf16.msra.mxu0 %v2115
    %2412 = vmatprep.subr.bf16.mxu0 %v2110
    %2413 = vmatpush2.bf16.msra.mxu0 %v2109
    %2414 = vmatprep.subr.bf16.mxu0 %v2104
    %2415 = vmatpush2.bf16.msra.mxu0 %v2103
    %2416 = vmatprep.mubr.bf16.mxu0 %v1351
    %2417 = vmatmul.mubr.bf16.gmra.mxu0 %v1350
    %v2418 = vpop.f32.mrf.mxu0
    %v2419 = vadd.f32 %v2378, %v2418
    %v2420 = vpop.f32.mrf.mxu0
    %v2421 = vadd.f32 %v2380, %v2420
    %v2422 = vpop.f32.mrf.mxu0
    %v2423 = vpop.f32.mrf.mxu0
    %2424 = vdwg.mxu0
    %2425 = vmatprep.subr.bf16.mxu0 %v2004
    %2426 = vmatpush1.bf16.msra.mxu0 %v2003
    %2427 = vmatprep.subr.bf16.mxu0 %v1998
    %2428 = vmatpush1.bf16.msra.mxu0 %v1997
    %2429 = vmatprep.subr.bf16.mxu0 %v1992
    %2430 = vmatpush1.bf16.msra.mxu0 %v1991
    %2431 = vmatprep.subr.bf16.mxu0 %v1986
    %2432 = vmatpush1.bf16.msra.mxu0 %v1985
    %2433 = vmatprep.subr.bf16.mxu0 %v1980
    %2434 = vmatpush1.bf16.msra.mxu0 %v1979
    %2435 = vmatprep.subr.bf16.mxu0 %v1974
    %2436 = vmatpush1.bf16.msra.mxu0 %v1973
    %2437 = vmatprep.subr.bf16.mxu0 %v1968
    %2438 = vmatpush1.bf16.msra.mxu0 %v1967
    %2439 = vmatprep.subr.bf16.mxu0 %v1962
    %2440 = vmatpush1.bf16.msra.mxu0 %v1961
    %2441 = vmatprep.subr.bf16.mxu0 %v2052
    %2442 = vmatpush2.bf16.msra.mxu0 %v2051
    %2443 = vmatprep.subr.bf16.mxu0 %v2046
    %2444 = vmatpush2.bf16.msra.mxu0 %v2045
    %2445 = vmatprep.subr.bf16.mxu0 %v2040
    %2446 = vmatpush2.bf16.msra.mxu0 %v2039
    %2447 = vmatprep.subr.bf16.mxu0 %v2034
    %2448 = vmatpush2.bf16.msra.mxu0 %v2033
    %2449 = vmatprep.subr.bf16.mxu0 %v2028
    %2450 = vmatpush2.bf16.msra.mxu0 %v2027
    %2451 = vmatprep.subr.bf16.mxu0 %v2022
    %2452 = vmatpush2.bf16.msra.mxu0 %v2021
    %2453 = vmatprep.subr.bf16.mxu0 %v2016
    %2454 = vmatpush2.bf16.msra.mxu0 %v2015
    %2455 = vmatprep.subr.bf16.mxu0 %v2010
    %2456 = vmatpush2.bf16.msra.mxu0 %v2009
    %2457 = vmatprep.mubr.bf16.mxu0 %v1349
    %2458 = vmatmul.mubr.bf16.gmra.mxu0 %v1348
    %v2459 = vpop.f32.mrf.mxu0
    %v2460 = vadd.f32 %v1364, %v2459
    %v2461 = vpop.f32.mrf.mxu0
    %v2462 = vadd.f32 %v1368, %v2461
    %v2463 = vpop.f32.mrf.mxu0
    %v2464 = vpop.f32.mrf.mxu0
    %2465 = vdwg.mxu0
    %2466 = vmatprep.subr.bf16.mxu0 %v2100
    %2467 = vmatpush1.bf16.msra.mxu0 %v2099
    %2468 = vmatprep.subr.bf16.mxu0 %v2094
    %2469 = vmatpush1.bf16.msra.mxu0 %v2093
    %2470 = vmatprep.subr.bf16.mxu0 %v2088
    %2471 = vmatpush1.bf16.msra.mxu0 %v2087
    %2472 = vmatprep.subr.bf16.mxu0 %v2082
    %2473 = vmatpush1.bf16.msra.mxu0 %v2081
    %2474 = vmatprep.subr.bf16.mxu0 %v2076
    %2475 = vmatpush1.bf16.msra.mxu0 %v2075
    %2476 = vmatprep.subr.bf16.mxu0 %v2070
    %2477 = vmatpush1.bf16.msra.mxu0 %v2069
    %2478 = vmatprep.subr.bf16.mxu0 %v2064
    %2479 = vmatpush1.bf16.msra.mxu0 %v2063
    %2480 = vmatprep.subr.bf16.mxu0 %v2058
    %2481 = vmatpush1.bf16.msra.mxu0 %v2057
    %2482 = vmatprep.subr.bf16.mxu0 %v2148
    %2483 = vmatpush2.bf16.msra.mxu0 %v2147
    %2484 = vmatprep.subr.bf16.mxu0 %v2142
    %2485 = vmatpush2.bf16.msra.mxu0 %v2141
    %2486 = vmatprep.subr.bf16.mxu0 %v2136
    %2487 = vmatpush2.bf16.msra.mxu0 %v2135
    %2488 = vmatprep.subr.bf16.mxu0 %v2130
    %2489 = vmatpush2.bf16.msra.mxu0 %v2129
    %2490 = vmatprep.subr.bf16.mxu0 %v2124
    %2491 = vmatpush2.bf16.msra.mxu0 %v2123
    %2492 = vmatprep.subr.bf16.mxu0 %v2118
    %2493 = vmatpush2.bf16.msra.mxu0 %v2117
    %2494 = vmatprep.subr.bf16.mxu0 %v2112
    %2495 = vmatpush2.bf16.msra.mxu0 %v2111
    %2496 = vmatprep.subr.bf16.mxu0 %v2106
    %2497 = vmatpush2.bf16.msra.mxu0 %v2105
    %2498 = vmatprep.mubr.bf16.mxu0 %v1351
    %2499 = vmatmul.mubr.bf16.gmra.mxu0 %v1350
    %v2500 = vpop.f32.mrf.mxu0
    %v2501 = vadd.f32 %v2460, %v2500
    %v2502 = vpop.f32.mrf.mxu0
    %v2503 = vadd.f32 %v2462, %v2502
    %v2504 = vpop.f32.mrf.mxu0
    %v2505 = vpop.f32.mrf.mxu0
    %2506 = vdwg.mxu0
    %2507 = vmatprep.subr.bf16.mxu0 %v2006
    %2508 = vmatpush1.bf16.msra.mxu0 %v2005
    %2509 = vmatprep.subr.bf16.mxu0 %v2000
    %2510 = vmatpush1.bf16.msra.mxu0 %v1999
    %2511 = vmatprep.subr.bf16.mxu0 %v1994
    %2512 = vmatpush1.bf16.msra.mxu0 %v1993
    %2513 = vmatprep.subr.bf16.mxu0 %v1988
    %2514 = vmatpush1.bf16.msra.mxu0 %v1987
    %2515 = vmatprep.subr.bf16.mxu0 %v1982
    %2516 = vmatpush1.bf16.msra.mxu0 %v1981
    %2517 = vmatprep.subr.bf16.mxu0 %v1976
    %2518 = vmatpush1.bf16.msra.mxu0 %v1975
    %2519 = vmatprep.subr.bf16.mxu0 %v1970
    %2520 = vmatpush1.bf16.msra.mxu0 %v1969
    %2521 = vmatprep.subr.bf16.mxu0 %v1964
    %2522 = vmatpush1.bf16.msra.mxu0 %v1963
    %2523 = vmatprep.subr.bf16.mxu0 %v2054
    %2524 = vmatpush2.bf16.msra.mxu0 %v2053
    %2525 = vmatprep.subr.bf16.mxu0 %v2048
    %2526 = vmatpush2.bf16.msra.mxu0 %v2047
    %2527 = vmatprep.subr.bf16.mxu0 %v2042
    %2528 = vmatpush2.bf16.msra.mxu0 %v2041
    %2529 = vmatprep.subr.bf16.mxu0 %v2036
    %2530 = vmatpush2.bf16.msra.mxu0 %v2035
    %2531 = vmatprep.subr.bf16.mxu0 %v2030
    %2532 = vmatpush2.bf16.msra.mxu0 %v2029
    %2533 = vmatprep.subr.bf16.mxu0 %v2024
    %2534 = vmatpush2.bf16.msra.mxu0 %v2023
    %2535 = vmatprep.subr.bf16.mxu0 %v2018
    %2536 = vmatpush2.bf16.msra.mxu0 %v2017
    %2537 = vmatprep.subr.bf16.mxu0 %v2012
    %2538 = vmatpush2.bf16.msra.mxu0 %v2011
    %2539 = vmatprep.mubr.bf16.mxu0 %v1349
    %2540 = vmatmul.mubr.bf16.gmra.mxu0 %v1348
    %v2541 = vpop.f32.mrf.mxu0
    %v2542 = vadd.f32 %v1372, %v2541
    %v2543 = vpop.f32.mrf.mxu0
    %v2544 = vadd.f32 %v1376, %v2543
    %v2545 = vpop.f32.mrf.mxu0
    %v2546 = vpop.f32.mrf.mxu0
    %2547 = vdwg.mxu0
    %2548 = vmatprep.subr.bf16.mxu0 %v2102
    %2549 = vmatpush1.bf16.msra.mxu0 %v2101
    %2550 = vmatprep.subr.bf16.mxu0 %v2096
    %2551 = vmatpush1.bf16.msra.mxu0 %v2095
    %2552 = vmatprep.subr.bf16.mxu0 %v2090
    %2553 = vmatpush1.bf16.msra.mxu0 %v2089
    %2554 = vmatprep.subr.bf16.mxu0 %v2084
    %2555 = vmatpush1.bf16.msra.mxu0 %v2083
    %2556 = vmatprep.subr.bf16.mxu0 %v2078
    %2557 = vmatpush1.bf16.msra.mxu0 %v2077
    %2558 = vmatprep.subr.bf16.mxu0 %v2072
    %2559 = vmatpush1.bf16.msra.mxu0 %v2071
    %2560 = vmatprep.subr.bf16.mxu0 %v2066
    %2561 = vmatpush1.bf16.msra.mxu0 %v2065
    %2562 = vmatprep.subr.bf16.mxu0 %v2060
    %2563 = vmatpush1.bf16.msra.mxu0 %v2059
    %2564 = vmatprep.subr.bf16.mxu0 %v2150
    %2565 = vmatpush2.bf16.msra.mxu0 %v2149
    %2566 = vmatprep.subr.bf16.mxu0 %v2144
    %2567 = vmatpush2.bf16.msra.mxu0 %v2143
    %2568 = vmatprep.subr.bf16.mxu0 %v2138
    %2569 = vmatpush2.bf16.msra.mxu0 %v2137
    %2570 = vmatprep.subr.bf16.mxu0 %v2132
    %2571 = vmatpush2.bf16.msra.mxu0 %v2131
    %2572 = vmatprep.subr.bf16.mxu0 %v2126
    %2573 = vmatpush2.bf16.msra.mxu0 %v2125
    %2574 = vmatprep.subr.bf16.mxu0 %v2120
    %2575 = vmatpush2.bf16.msra.mxu0 %v2119
    %2576 = vmatprep.subr.bf16.mxu0 %v2114
    %2577 = vmatpush2.bf16.msra.mxu0 %v2113
    %2578 = vmatprep.subr.bf16.mxu0 %v2108
    %2579 = vmatpush2.bf16.msra.mxu0 %v2107
    %2580 = vmatprep.mubr.bf16.mxu0 %v1351
    %2581 = vmatmul.mubr.bf16.gmra.mxu0 %v1350
    %v2582 = vpop.f32.mrf.mxu0
    %v2583 = vadd.f32 %v2542, %v2582
    %v2584 = vpop.f32.mrf.mxu0
    %v2585 = vadd.f32 %v2544, %v2584
    %v2586 = vpop.f32.mrf.mxu0
    %v2587 = vpop.f32.mrf.mxu0
    %2588 = vdwg.mxu0
    %v2595 = vcombine.low %v2419, %v2421
    %v2596 = vcombine.low %v2501, %v2503
    %v2598 = vunpack.c.l.s4 1983009808
    %v2599 = vunpack.c.0.s8 %v2598
    %v2600 = vlaneseq
    %v2601 = vshrl.u32 %v2600, 7
    %v2602 = vsub.s32 %v2599, %v2601
    %v2603 = vrot.slane %v2595, %v2602
    %v2605 = vunpack.c.l.s4 1983009808
    %v2606 = vunpack.c.0.s8 %v2605
    %v2607 = vlaneseq
    %v2608 = vshrl.u32 %v2607, 7
    %v2609 = vsub.s32 %v2606, %v2608
    %v2610 = vrot.slane %v2596, %v2609
    %v2611 = vcombine.low %v2603, %v2610
    %v2612 = vcombine.low %v2583, %v2585
    %v2614 = vunpack.c.l.s4 1983009808
    %v2615 = vunpack.c.0.s8 %v2614
    %v2616 = vlaneseq
    %v2617 = vshrl.u32 %v2616, 7
    %v2618 = vsub.s32 %v2615, %v2617
    %v2619 = vrot.slane %v2612, %v2618
    %2622 = vst [vmem:[%s4] sm:$0xff] %v2611
    %2623 = vst [vmem:[%s4 + $0x8] sm:$0xf] %v2619
    %v2624 = vld [vmem:[#allocation5 + $0x10] sm:$0xf]
    %v2625 = vld [vmem:[#allocation5 + $0x28] sm:$0xf]
    %v2626 = vld [vmem:[#allocation5 + $0x40] sm:$0xf]
    %v2627 = vld [vmem:[#allocation5 + $0x58] sm:$0xf]
    %v2628 = vld [vmem:[#allocation5 + $0x14] sm:$0xf]
    %v2629 = vld [vmem:[#allocation5 + $0x2c] sm:$0xf]
    %v2630 = vld [vmem:[#allocation5 + $0x44] sm:$0xf]
    %v2631 = vld [vmem:[#allocation5 + $0x5c] sm:$0xf]
    %v2632 = vld [vmem:[#allocation5 + $0x660] sm:$0xf]
    %v2633 = vld [vmem:[#allocation5 + $0x678] sm:$0xf]
    %v2634 = vld [vmem:[#allocation5 + $0x690] sm:$0xf]
    %v2635 = vld [vmem:[#allocation5 + $0x6a8] sm:$0xf]
    %v2636 = vld [vmem:[#allocation8 + $0x21] ss:$0 sm:$0xff]
    %v2637 = vld [vmem:[#allocation8 + $0x29] ss:$0 sm:$0xff]
    %v2638 = vld [vmem:[#allocation8 + $0x22] ss:$0 sm:$0xff]
    %v2639 = vld [vmem:[#allocation8 + $0x2a] ss:$0 sm:$0xff]
    %v2640 = vld [vmem:[#allocation8 + $0x20] ss:$0 sm:$0xff]
    %v2645 = vunpack.c.l.b16 %v2624
    %v2646 = vunpack.c.l.b16 %v2625
    %v2647 = vunpack.c.l.b16 %v2626
    %v2648 = vunpack.c.l.b16 %v2627
    %v2649 = vpack.c.b16 %v2646, %v2645
    %v2650 = vpack.c.b16 %v2648, %v2647
    %2653 = vmatprep.subr.bf16.mxu0 0
    %2654 = vmatpush1.bf16.msra.mxu0 0
    %2655 = vmatprep.subr.bf16.mxu0 0
    %2656 = vmatpush1.bf16.msra.mxu0 0
    %2657 = vmatprep.subr.bf16.mxu0 0
    %2658 = vmatpush1.bf16.msra.mxu0 0
    %2659 = vmatprep.subr.bf16.mxu0 0
    %2660 = vmatpush1.bf16.msra.mxu0 0
    %2661 = vmatprep.subr.bf16.mxu0 0
    %2662 = vmatpush1.bf16.msra.mxu0 0
    %2663 = vmatprep.subr.bf16.mxu0 0
    %2664 = vmatpush1.bf16.msra.mxu0 0
    %2665 = vmatprep.subr.bf16.mxu0 0
    %2666 = vmatpush1.bf16.msra.mxu0 %v2650
    %2667 = vmatprep.subr.bf16.mxu0 0
    %2668 = vmatpush1.bf16.msra.mxu0 %v2649
    %2669 = vmatprep.subr.bf16.mxu0 0
    %2670 = vmatpush2.bf16.msra.mxu0 0
    %2671 = vmatprep.subr.bf16.mxu0 0
    %2672 = vmatpush2.bf16.msra.mxu0 0
    %2673 = vmatprep.subr.bf16.mxu0 0
    %2674 = vmatpush2.bf16.msra.mxu0 0
    %2675 = vmatprep.subr.bf16.mxu0 0
    %2676 = vmatpush2.bf16.msra.mxu0 0
    %2677 = vmatprep.subr.bf16.mxu0 0
    %2678 = vmatpush2.bf16.msra.mxu0 0
    %2679 = vmatprep.subr.bf16.mxu0 0
    %2680 = vmatpush2.bf16.msra.mxu0 0
    %2681 = vmatprep.subr.bf16.mxu0 0
    %2682 = vmatpush2.bf16.msra.mxu0 0
    %2683 = vmatprep.subr.bf16.mxu0 0
    %2684 = vmatpush2.bf16.msra.mxu0 0
    %2685 = vmatprep.mubr.bf16.mxu0 0
    %2686 = vmatmul.mubr.bf16.gmra.mxu0 %v146
    %v2687 = vpop.f32.mrf.mxu0
    %v2688 = vadd.f32 0.0, %v2687
    %v2689 = vpop.f32.mrf.mxu0
    %v2690 = vpop.f32.mrf.mxu0
    %v2691 = vpop.f32.mrf.mxu0
    %2692 = vdwg.mxu0
    %vm2693 = vcmask 254976
    %v2694 = vsel %vm2693, %v2688, 0.0
    %2695 = vadd.xlane.f32.xlu0 %v2694
    %v2696 = vpop.xlane.xlu0 %2695
    %v2697 = vrcp.pop 32.0
    %v2698 = vmul.f32 %v2696, %v2697
    %v2699 = vsub.f32 %v2688, %v2698
    %v2700 = vmul.f32 %v2699, %v2699
    %v2701 = vsel %vm2693, %v2700, 0.0
    %2702 = vadd.xlane.f32.xlu0 %v2701
    %v2703 = vpop.xlane.xlu0 %2702
    %v2704 = vmul.f32 %v2703, %v2697
    %v2705 = vadd.f32 %v2704, 0.001
    %v2706 = vrsqrt.pop %v2705
    %v2707 = vmul.f32 %v2699, %v2706
    %v2708 = vmul.f32 %v2707, %v2636
    %v2709 = vadd.f32 %v2708, %v2637
    %v2710 = vxor.u32 %v2709, 2147483648
    %v2711 = vmul.f32 %v2710, 1.442695
    %v2712 = vpow.pop %v2711
    %v2713 = vadd.f32 %v2712, 1.0
    %v2714 = vrcp.pop %v2713
    %v2715 = vmul.f32 1.0, %v2714
    %v2716 = vmul.f32 %v2709, %v2715
    %v2717 = vpack.c.bf16 %v2716, %v2716
    %v2722 = vunpack.c.l.b16 %v2628
    %v2723 = vunpack.c.l.b16 %v2629
    %v2724 = vunpack.c.l.b16 %v2630
    %v2725 = vunpack.c.l.b16 %v2631
    %v2726 = vpack.c.b16 %v2723, %v2722
    %v2727 = vpack.c.b16 %v2725, %v2724
    %v2731 = vsel %vm144, %v2717, 0
    %2733 = vmatprep.subr.bf16.mxu0 0
    %2734 = vmatpush1.bf16.msra.mxu0 0
    %2735 = vmatprep.subr.bf16.mxu0 0
    %2736 = vmatpush1.bf16.msra.mxu0 0
    %2737 = vmatprep.subr.bf16.mxu0 0
    %2738 = vmatpush1.bf16.msra.mxu0 0
    %2739 = vmatprep.subr.bf16.mxu0 0
    %2740 = vmatpush1.bf16.msra.mxu0 0
    %2741 = vmatprep.subr.bf16.mxu0 0
    %2742 = vmatpush1.bf16.msra.mxu0 0
    %2743 = vmatprep.subr.bf16.mxu0 0
    %2744 = vmatpush1.bf16.msra.mxu0 0
    %2745 = vmatprep.subr.bf16.mxu0 0
    %2746 = vmatpush1.bf16.msra.mxu0 %v2727
    %2747 = vmatprep.subr.bf16.mxu0 0
    %2748 = vmatpush1.bf16.msra.mxu0 %v2726
    %2749 = vmatprep.subr.bf16.mxu0 0
    %2750 = vmatpush2.bf16.msra.mxu0 0
    %2751 = vmatprep.subr.bf16.mxu0 0
    %2752 = vmatpush2.bf16.msra.mxu0 0
    %2753 = vmatprep.subr.bf16.mxu0 0
    %2754 = vmatpush2.bf16.msra.mxu0 0
    %2755 = vmatprep.subr.bf16.mxu0 0
    %2756 = vmatpush2.bf16.msra.mxu0 0
    %2757 = vmatprep.subr.bf16.mxu0 0
    %2758 = vmatpush2.bf16.msra.mxu0 0
    %2759 = vmatprep.subr.bf16.mxu0 0
    %2760 = vmatpush2.bf16.msra.mxu0 0
    %2761 = vmatprep.subr.bf16.mxu0 0
    %2762 = vmatpush2.bf16.msra.mxu0 0
    %2763 = vmatprep.subr.bf16.mxu0 0
    %2764 = vmatpush2.bf16.msra.mxu0 0
    %2765 = vmatprep.mubr.bf16.mxu0 0
    %2766 = vmatmul.mubr.bf16.gmra.mxu0 %v2731
    %v2767 = vpop.f32.mrf.mxu0
    %v2768 = vadd.f32 0.0, %v2767
    %v2769 = vpop.f32.mrf.mxu0
    %v2770 = vpop.f32.mrf.mxu0
    %v2771 = vpop.f32.mrf.mxu0
    %2772 = vdwg.mxu0
    %v2773 = vsel %vm2693, %v2768, 0.0
    %2774 = vadd.xlane.f32.xlu0 %v2773
    %v2775 = vpop.xlane.xlu0 %2774
    %v2776 = vmul.f32 %v2775, %v2697
    %v2777 = vsub.f32 %v2768, %v2776
    %v2778 = vmul.f32 %v2777, %v2777
    %v2779 = vsel %vm2693, %v2778, 0.0
    %2780 = vadd.xlane.f32.xlu0 %v2779
    %v2781 = vpop.xlane.xlu0 %2780
    %v2782 = vmul.f32 %v2781, %v2697
    %v2783 = vadd.f32 %v2782, 0.001
    %v2784 = vrsqrt.pop %v2783
    %v2785 = vmul.f32 %v2777, %v2784
    %v2786 = vmul.f32 %v2785, %v2638
    %v2787 = vadd.f32 %v2786, %v2639
    %v2788 = vxor.u32 %v2787, 2147483648
    %v2789 = vmul.f32 %v2788, 1.442695
    %v2790 = vpow.pop %v2789
    %v2791 = vadd.f32 %v2790, 1.0
    %v2792 = vrcp.pop %v2791
    %v2793 = vmul.f32 1.0, %v2792
    %v2794 = vmul.f32 %v2787, %v2793
    %v2795 = vpack.c.bf16 %v2794, %v2794
    %v2800 = vunpack.c.l.b16 %v2632
    %v2801 = vunpack.c.l.b16 %v2633
    %v2802 = vunpack.c.l.b16 %v2634
    %v2803 = vunpack.c.l.b16 %v2635
    %v2804 = vpack.c.b16 %v2801, %v2800
    %v2805 = vpack.c.b16 %v2803, %v2802
    %v2809 = vsel %vm144, %v2795, 0
    %2811 = vmatprep.subr.bf16.mxu0 0
    %2812 = vmatpush1.bf16.msra.mxu0 0
    %2813 = vmatprep.subr.bf16.mxu0 0
    %2814 = vmatpush1.bf16.msra.mxu0 0
    %2815 = vmatprep.subr.bf16.mxu0 0
    %2816 = vmatpush1.bf16.msra.mxu0 0
    %2817 = vmatprep.subr.bf16.mxu0 0
    %2818 = vmatpush1.bf16.msra.mxu0 0
    %2819 = vmatprep.subr.bf16.mxu0 0
    %2820 = vmatpush1.bf16.msra.mxu0 0
    %2821 = vmatprep.subr.bf16.mxu0 0
    %2822 = vmatpush1.bf16.msra.mxu0 0
    %2823 = vmatprep.subr.bf16.mxu0 0
    %2824 = vmatpush1.bf16.msra.mxu0 %v2805
    %2825 = vmatprep.subr.bf16.mxu0 0
    %2826 = vmatpush1.bf16.msra.mxu0 %v2804
    %2827 = vmatprep.subr.bf16.mxu0 0
    %2828 = vmatpush2.bf16.msra.mxu0 0
    %2829 = vmatprep.subr.bf16.mxu0 0
    %2830 = vmatpush2.bf16.msra.mxu0 0
    %2831 = vmatprep.subr.bf16.mxu0 0
    %2832 = vmatpush2.bf16.msra.mxu0 0
    %2833 = vmatprep.subr.bf16.mxu0 0
    %2834 = vmatpush2.bf16.msra.mxu0 0
    %2835 = vmatprep.subr.bf16.mxu0 0
    %2836 = vmatpush2.bf16.msra.mxu0 0
    %2837 = vmatprep.subr.bf16.mxu0 0
    %2838 = vmatpush2.bf16.msra.mxu0 0
    %2839 = vmatprep.subr.bf16.mxu0 0
    %2840 = vmatpush2.bf16.msra.mxu0 0
    %2841 = vmatprep.subr.bf16.mxu0 0
    %2842 = vmatpush2.bf16.msra.mxu0 0
    %2843 = vmatprep.mubr.bf16.mxu0 0
    %2844 = vmatmul.mubr.bf16.gmra.mxu0 %v2809
    %v2845 = vpop.f32.mrf.mxu0
    %v2846 = vadd.f32 %v2640, %v2845
    %v2847 = vpop.f32.mrf.mxu0
    %v2848 = vpop.f32.mrf.mxu0
    %v2849 = vpop.f32.mrf.mxu0
    %2850 = vdwg.mxu0
    %2851 = vst [vmem:[#allocation10] sm:$0x3] %v2846
    // Predicated region
    $region34: #{multi_decoder_forward.1} parent=1 // pred_check
      _
    $region35: #{multi_decoder_forward.1} parent=1 // pred_check_branch
      %2853 = sbr.rel (0) target = $region37
    $region36: #{multi_decoder_forward.1} parent=1 // pred_region
      _
    $region37: #{multi_decoder_forward.1} parent=1 // pred_fallthru
      _
    // Predicated region
    $region38: #{multi_decoder_forward.1} parent=1 // pred_check
      _
    $region39: #{multi_decoder_forward.1} parent=1 // pred_check_branch
      %2855 = sbr.rel (0) target = $region41
    $region40: #{multi_decoder_forward.1} parent=1 // pred_region
      %s2857 = ssub.s32 32, 32
      %2858 = vsyncadd [#allocation4], %s2857
      %s2860 = sshll.u32 [#allocation10], 4
      %s2861 = int_to_ptr.vmem [resolvable:$true] %s2860
      %2863 = dma.vmem_to_hbm [thread:$0]  %s2861, 32, %s5, [#allocation4]
    $region41: #{multi_decoder_forward.1} parent=1 // pred_fallthru
      _
    // Predicated region
    $region42: #{multi_decoder_forward.1} parent=1 // pred_check
      _
    $region43: #{multi_decoder_forward.1} parent=1 // pred_check_branch
      %2865 = sbr.rel (0) target = $region45
    $region44: #{multi_decoder_forward.1} parent=1 // pred_region
      _
    $region45: #{multi_decoder_forward.1} parent=1 // pred_fallthru
      _
    // Predicated region
    $region46: #{multi_decoder_forward.1} parent=1 // pred_check
      _
    $region47: #{multi_decoder_forward.1} parent=1 // pred_check_branch
      %2867 = sbr.rel (0) target = $region49
    $region48: #{multi_decoder_forward.1} parent=1 // pred_region
      %2868 = dma.done [#allocation4], 32
    $region49: #{multi_decoder_forward.1} parent=1 // pred_fallthru
      _
    %2869 = vsyncpa [#allocation3], 1
    %2870 = vsyncpa [#allocation6], 1
    %2871 = vsyncpa [#allocation9], 1
    %2872 = vsyncpa [#allocation4], 1

</llo_original>
